<compile_context>
chip_gen: v6e
topology: v6e:2x2x1
jax: 0.10.0
libtpu: 0.0.40
codegen_flags: <defaults>
</compile_context>

<pallas_src>
import functools

import jax
import jax.numpy as jnp
from jax.experimental import pallas as pl
from jax.experimental.pallas import tpu as pltpu

_RF = 13        # cumulative receptive-field halo of the dilated convs (1+3+9)
_EDGE = 9       # guard margin so dilated-shift reads never leave the scratch
_DECIMATE_IN_KERNEL = True   # flipped off if lane-strided slicing fails to lower


def _elu(v):
    # exp only on the clamped-negative side: no overflow -> no inf/NaN.
    return jnp.where(v > 0, v, jnp.exp(jnp.minimum(v, 0.0)) - 1.0)


def encoder_block_kernel(x_ref, w3s_ref, b3s_ref, w1_ref, b1_ref, wf_ref, bf_ref,
                         o_ref, buf_ref, *, stride, channels, tl, w,
                         left_fill, right_fill, decimate):
    f32, bf16 = jnp.float32, jnp.bfloat16
    c, e = channels, _EDGE
    wbuf = buf_ref.shape[1]
    ti = pl.program_id(1)

    # Guard margins are only read (never rewritten) by shifted-tap loads of the
    # (discarded) edge columns; keep them finite.
    buf_ref[:, 0:e] = jnp.zeros((c, e), bf16)
    buf_ref[:, e + w:wbuf] = jnp.zeros((c, wbuf - (e + w)), bf16)

    def stage(y_bf):
        """Write the working row into the halo scratch; tiles touching the true
        sequence ends re-apply replicate padding at every layer, exactly like
        PyTorch's padding_mode='replicate'. Interior tile boundaries keep the
        real neighbour data that came in with the halo window."""
        buf_ref[:, pl.ds(e, w)] = y_bf
        for t_idx, n_pad in left_fill:              # static schedule
            @pl.when(ti == t_idx)
            def _(n_pad=n_pad):
                edge = buf_ref[:, pl.ds(n_pad, 1)]
                buf_ref[:, pl.ds(0, n_pad)] = jnp.broadcast_to(edge, (c, n_pad))
        for t_idx, start in right_fill:             # static schedule
            @pl.when(ti == t_idx)
            def _(start=start):
                n_pad = wbuf - start
                edge = buf_ref[:, pl.ds(start - 1, 1)]
                buf_ref[:, pl.ds(start, n_pad)] = jnp.broadcast_to(edge, (c, n_pad))

    y_bf = x_ref[0, 0]                               # (C, W) bf16

    # ---- 3 ResidualUnits, dilations 1, 3, 9 (mod_block == identity) --------
    # Skip 1x1 fused into the 3-tap matmul: rows [0:C] of w3s are the dilated
    # conv, rows [C:2C] are the skip (placed under the centre tap), so one MXU
    # push produces both the conv pre-activation and the skip branch.
    for r in range(3):
        d = 3 ** r
        stage(y_bf)
        xm = buf_ref[:, pl.ds(e - d, w)]             # y[t - d] (replicated at ends)
        xp = buf_ref[:, pl.ds(e + d, w)]             # y[t + d]
        cat = jnp.concatenate([xm, y_bf, xp], axis=0)            # (3C, W) bf16
        g = jnp.dot(w3s_ref[r], cat, preferred_element_type=f32) + b3s_ref[r]
        h = _elu(g[:c])
        h = jnp.dot(w1_ref[r], h.astype(bf16), preferred_element_type=f32) + b1_ref[r]
        y = _elu(h) + g[c:]                          # (C, W) f32
        y_bf = y.astype(bf16)

    # ---- Conv1d(C -> 2C, k=2s, stride=s, replicate pad s//2) + ELU ---------
    stage(y_bf)
    taps = [buf_ref[:, pl.ds(e + _RF + k, tl)] for k in range(2 * stride)]
    catf = jnp.concatenate(taps, axis=0)             # (2sC, TL) bf16
    full = jnp.dot(wf_ref[...], catf, preferred_element_type=f32) + bf_ref[...]
    full = _elu(full)                                # (2C, TL) f32, stride-1 eval
    if decimate:
        o_ref[0] = full[:, ::stride]                 # keep every s-th column
    else:
        o_ref[0] = full                              # wrapper decimates


# --------------------------------------------------------------------------- #
# parameters
# --------------------------------------------------------------------------- #
def init_params(key, channels, stride):
    """Effective (post weight-norm) parameters in PyTorch Conv1d layouts."""
    c, k = channels, 2 * stride
    keys = jax.random.split(key, 20)

    def nrm(kk, shape, scale):
        return scale * jax.random.normal(kk, shape, jnp.float32)

    p = {"w3": [], "b3": [], "w1": [], "b1": [], "ws": [], "bs": []}
    i = 0
    for _ in range(3):
        p["w3"].append(nrm(keys[i + 0], (c, c, 3), 0.2))    # torch Conv1d: (out, in, k)
        p["b3"].append(nrm(keys[i + 1], (c,), 0.05))
        p["w1"].append(nrm(keys[i + 2], (c, c, 1), 0.2))
        p["b1"].append(nrm(keys[i + 3], (c,), 0.05))
        p["ws"].append(nrm(keys[i + 4], (c, c, 1), 0.2))
        p["bs"].append(nrm(keys[i + 5], (c,), 0.05))
        i += 6
    p["wf"] = nrm(keys[18], (2 * c, c, k), 0.15)
    p["bf"] = nrm(keys[19], (2 * c,), 0.05)
    return p


def pack_params(params):
    """One-time repacking into kernel layouts: tap-stacked bf16 matmul weights,
    skip 1x1 fused under the centre tap of the 3-tap weight."""
    c = params["wf"].shape[1]
    bf16 = jnp.bfloat16
    w3s, b3s = [], []
    for r in range(3):
        w3 = jnp.transpose(params["w3"][r], (0, 2, 1)).reshape(c, 3 * c)
        zed = jnp.zeros((c, c), jnp.float32)
        wsk = jnp.concatenate([zed, params["ws"][r][:, :, 0], zed], axis=1)
        w3s.append(jnp.concatenate([w3, wsk], axis=0))           # (2C, 3C)
        b3s.append(jnp.concatenate([params["b3"][r], params["bs"][r]]).reshape(2 * c, 1))
    return dict(
        w3s=jnp.stack(w3s).astype(bf16),                         # (3, 2C, 3C)
        b3s=jnp.stack(b3s),                                      # (3, 2C, 1) f32
        w1=jnp.stack([w[:, :, 0] for w in params["w1"]]).astype(bf16),
        b1=jnp.stack([b.reshape(c, 1) for b in params["b1"]]),
        wf=jnp.transpose(params["wf"], (0, 2, 1)).reshape(2 * c, -1).astype(bf16),
        bf=params["bf"].reshape(2 * c, 1),
    )


# --------------------------------------------------------------------------- #
# tiling / VMEM sizing
# --------------------------------------------------------------------------- #
def _round_up(v, m):
    return -(-v // m) * m


def _vmem_estimate(c, tlout, stride):
    tl = tlout * stride
    w = tl + 2 * _RF + stride // 2 + stride
    est = 0
    est += 2 * c * w * 2                        # x window (bf16, double-buffered)
    est += 2 * (2 * c) * tl * 4                 # out block (f32, double-buffered)
    est += c * (w + 2 * _EDGE) * 2              # halo scratch (bf16)
    est += 3 * c * w * 2                        # 3-tap concat operand (bf16)
    est += 3 * (2 * c) * w * 4                  # f32 temporaries (g / h / y)
    est += (2 * stride * c) * tl * 2            # final-conv tap concat (bf16)
    est += (2 * c) * tl * 4                     # stride-1 conv result (f32)
    est += (3 * 7 * c * c + 4 * stride * c * c) * 2 + 64 * c   # weights
    return est


def _choose_tlout(t_out, cap, c, stride, budget=20 * 2 ** 20):
    if t_out <= min(cap, 1024) and _vmem_estimate(c, t_out, stride) <= budget:
        return t_out
    tlout = min(_round_up(t_out, 128), 1024, max(128, (cap // 128) * 128))
    nt = -(-t_out // tlout)
    tlout = min(tlout, _round_up(-(-t_out // nt), 128))
    while tlout > 128 and _vmem_estimate(c, tlout, stride) > budget:
        tlout = max(128, _round_up(tlout // 2, 128))
    return tlout


# --------------------------------------------------------------------------- #
# wrapper
# --------------------------------------------------------------------------- #
def encoder_block(x, packed, *, stride, max_time_tile_out=1024):
    """Fused EncoderBlock forward: x (N, C, T) f32 -> (N, 2C, T_out) f32."""
    global _DECIMATE_IN_KERNEL
    n, c, t = x.shape
    s = stride
    assert 1 <= s <= 16, "stride outside supported range"
    p = s // 2
    t_out = (t + 2 * p - 2 * s) // s + 1
    assert t_out >= 1, "input too short for this stride"

    hl = _RF + p                    # left halo: dilated RF + replicate pad
    hr = _RF + s                    # right halo: dilated RF + last-window tail
    tlout = _choose_tlout(t_out, max_time_tile_out, c, s)
    nt = -(-t_out // tlout)
    tl = tlout * s                  # input columns covered per time tile
    w = tl + hl + hr                # per-tile working width
    wbuf = w + 2 * _EDGE

    # Overlapping halo windows (bf16): (N, nt, C, W).  Values in the padded
    # region are irrelevant: tiles touching the true ends re-apply replicate
    # padding per layer inside the kernel.
    pr = max(0, nt * tl + hr - t)
    x_ext = jnp.pad(x, ((0, 0), (0, 0), (hl, pr)))
    x_win = jnp.stack(
        [jax.lax.slice_in_dim(x_ext, i * tl, i * tl + w, axis=2) for i in range(nt)],
        axis=1).astype(jnp.bfloat16)

    # Static per-tile replicate-fill schedules (only tiles that touch the true
    # sequence ends appear).
    left_fill = tuple((i, _EDGE + hl - i * tl) for i in range(nt) if i * tl < hl)
    right_fill = tuple((i, _EDGE + t - i * tl + hl) for i in range(nt)
                       if t - i * tl + hl < w)

    weight_args = (packed["w3s"], packed["b3s"], packed["w1"], packed["b1"],
                   packed["wf"], packed["bf"])

    def full_spec(shape):
        nd = len(shape)
        return pl.BlockSpec(shape, lambda b, i, _nd=nd: (0,) * _nd)

    vmem_limit = int(min(64 * 2 ** 20,
                         max(32 * 2 ** 20, 2 * _vmem_estimate(c, tlout, s))))
    flops = 2 * n * nt * (3 * ((2 * c) * (3 * c) * w + c * c * w)
                          + (2 * c) * (2 * s * c) * tl)
    transc = n * nt * (6 * c * w + 2 * c * tl)
    w_bytes = sum(int(a.size) * a.dtype.itemsize for a in weight_args)

    def _call(decimate):
        tfin = tlout if decimate else tl
        kern = functools.partial(
            encoder_block_kernel, stride=s, channels=c, tl=tl, w=w,
            left_fill=left_fill, right_fill=right_fill, decimate=decimate)
        return pl.pallas_call(
            kern,
            out_shape=jax.ShapeDtypeStruct((n, 2 * c, nt * tfin), jnp.float32),
            grid=(n, nt),
            in_specs=[pl.BlockSpec((1, 1, c, w), lambda b, i: (b, i, 0, 0))]
                     + [full_spec(a.shape) for a in weight_args],
            out_specs=pl.BlockSpec((1, 2 * c, tfin), lambda b, i: (b, 0, i)),
            scratch_shapes=[pltpu.VMEM((c, wbuf), jnp.bfloat16)],
            compiler_params=pltpu.CompilerParams(
                dimension_semantics=("parallel", "parallel"),
                vmem_limit_bytes=vmem_limit),
            cost_estimate=pl.CostEstimate(
                flops=int(flops), transcendentals=int(transc),
                bytes_accessed=int(int(x_win.size) * 2
                                   + n * 2 * c * nt * tfin * 4 + w_bytes)),
        )(x_win, *weight_args)

    if _DECIMATE_IN_KERNEL:
        try:
            out = _call(True)[:, :, :t_out]
            return jax.block_until_ready(out)
        except Exception:
            # Lane-strided column select not supported on this backend/version:
            # fall back to stride-1 output + wrapper-side decimation.
            _DECIMATE_IN_KERNEL = False
    out = _call(False)
    return out[:, :, ::s][:, :, :t_out]


# --------------------------------------------------------------------------- #
# pure-JAX f32 reference of the PyTorch module (for validation only)
# --------------------------------------------------------------------------- #
def _conv1d_ref(x, w, b, *, stride=1, dilation=1, pad=0):
    if pad:
        x = jnp.pad(x, ((0, 0), (0, 0), (pad, pad)), mode="edge")
    dn = jax.lax.conv_dimension_numbers(x.shape, w.shape, ("NCH", "OIH", "NCH"))
    y = jax.lax.conv_general_dilated(
        x, w, window_strides=(stride,), padding="VALID",
        rhs_dilation=(dilation,), dimension_numbers=dn)
    return y + b[None, :, None]


def encoder_block_ref(x, params, *, stride):
    y = x
    for r in range(3):
        d = 3 ** r
        h = _conv1d_ref(y, params["w3"][r], params["b3"][r], dilation=d, pad=d)
        h = jax.nn.elu(h)
        h = _conv1d_ref(h, params["w1"][r], params["b1"][r])
        h = jax.nn.elu(h)
        y = h + _conv1d_ref(y, params["ws"][r], params["bs"][r])
    y = _conv1d_ref(y, params["wf"], params["bf"], stride=stride, pad=stride // 2)
    return jax.nn.elu(y)


if __name__ == "__main__":
    key = jax.random.PRNGKey(0)
    k1, k2, k3, k4 = jax.random.split(key, 4)

    def run_case(name, xkey, pkey, batch, channels, length, stride, **kw):
        x = jax.random.normal(xkey, (batch, channels, length), jnp.float32)
        params = init_params(pkey, channels, stride)
        packed = pack_params(params)
        out = jax.block_until_ready(encoder_block(x, packed, stride=stride, **kw))
        ref = encoder_block_ref(x, params, stride=stride)
        assert out.shape == ref.shape, (name, out.shape, ref.shape)
        assert bool(jnp.all(jnp.isfinite(out))), name
        err = float(jnp.max(jnp.abs(out - ref)))
        tol = 0.06 * (1.0 + float(jnp.max(jnp.abs(ref))))
        assert err <= tol, (name, err, tol)

    # small demo shape (single time tile)
    run_case("small", k1, k2, batch=2, channels=8, length=16, stride=2)
    # multi-tile path: 4 time tiles, exercises halo windows, interior tile
    # boundaries and per-layer replicate padding at the true sequence ends.
    run_case("tiled", k3, k4, batch=1, channels=16, length=2048, stride=4,
             max_time_tile_out=128)
    print("KERNEL_OK")
</pallas_src>

<mosaic_0001>
module attributes {stable_mosaic.version = 11 : i64} {
  func.func @encoder_block_kernel(%arg0: i32, %arg1: i32, %arg2: memref<1x1x8x45xbf16, #tpu.memory_space<vmem>>, %arg3: memref<3x16x24xbf16, #tpu.memory_space<vmem>>, %arg4: memref<3x16x1xf32, #tpu.memory_space<vmem>>, %arg5: memref<3x8x8xbf16, #tpu.memory_space<vmem>>, %arg6: memref<3x8x1xf32, #tpu.memory_space<vmem>>, %arg7: memref<16x32xbf16, #tpu.memory_space<vmem>>, %arg8: memref<16x1xf32, #tpu.memory_space<vmem>>, %arg9: memref<1x16x16xf32, #tpu.memory_space<vmem>>, %arg10: memref<8x63xbf16, #tpu.memory_space<vmem>>) attributes {dimension_semantics = [#tpu.dimension_semantics<parallel>, #tpu.dimension_semantics<parallel>], iteration_bounds = array<i64: 2, 1>, scalar_prefetch = 0 : i64, scratch_operands = 1 : i64, tpu.core_type = #tpu.core_type<tc>, window_params = [{transform_indices = @transform_0, window_bounds = array<i64: 1, 1, 8, 45>}, {pipeline_mode = #tpu.pipeline_mode<synchronous>, transform_indices = @transform_1, window_bounds = array<i64: 3, 16, 24>}, {pipeline_mode = #tpu.pipeline_mode<synchronous>, transform_indices = @transform_2, window_bounds = array<i64: 3, 16, 1>}, {pipeline_mode = #tpu.pipeline_mode<synchronous>, transform_indices = @transform_3, window_bounds = array<i64: 3, 8, 8>}, {pipeline_mode = #tpu.pipeline_mode<synchronous>, transform_indices = @transform_4, window_bounds = array<i64: 3, 8, 1>}, {pipeline_mode = #tpu.pipeline_mode<synchronous>, transform_indices = @transform_5, window_bounds = array<i64: 16, 32>}, {pipeline_mode = #tpu.pipeline_mode<synchronous>, transform_indices = @transform_6, window_bounds = array<i64: 16, 1>}, {transform_indices = @transform_7, window_bounds = array<i64: 1, 16, 16>}]} {
    %cst = arith.constant 0.000000e+00 : bf16
    %0 = vector.broadcast %cst : bf16 to vector<8x9xbf16>
    %c0 = arith.constant 0 : index
    %c0_0 = arith.constant 0 : index
    %1 = vector.load %arg10[%c0, %c0_0] : memref<8x63xbf16, #tpu.memory_space<vmem>>, vector<8x9xbf16>
    tpu.vector_store %arg10[%c0, %c0_0], %0 {strides = array<i32>} : memref<8x63xbf16, #tpu.memory_space<vmem>>, vector<8x9xbf16>,
    %cst_1 = arith.constant 0.000000e+00 : bf16
    %2 = vector.broadcast %cst_1 : bf16 to vector<8x9xbf16>
    %c0_2 = arith.constant 0 : index
    %c54 = arith.constant 54 : index
    %3 = vector.load %arg10[%c0_2, %c54] : memref<8x63xbf16, #tpu.memory_space<vmem>>, vector<8x9xbf16>
    tpu.vector_store %arg10[%c0_2, %c54], %2 {strides = array<i32>} : memref<8x63xbf16, #tpu.memory_space<vmem>>, vector<8x9xbf16>,
    %c0_3 = arith.constant 0 : index
    %c0_4 = arith.constant 0 : index
    %c0_5 = arith.constant 0 : index
    %c0_6 = arith.constant 0 : index
    %4 = vector.load %arg2[%c0_3, %c0_4, %c0_5, %c0_6] : memref<1x1x8x45xbf16, #tpu.memory_space<vmem>>, vector<1x1x8x45xbf16>
    %5 = vector.shape_cast %4 : vector<1x1x8x45xbf16> to vector<8x45xbf16>
    %c0_7 = arith.constant 0 : index
    %c9 = arith.constant 9 : index
    %6 = vector.load %arg10[%c0_7, %c9] : memref<8x63xbf16, #tpu.memory_space<vmem>>, vector<8x45xbf16>
    tpu.vector_store %arg10[%c0_7, %c9], %5 {strides = array<i32>} : memref<8x63xbf16, #tpu.memory_space<vmem>>, vector<8x45xbf16>,
    %c0_i32 = arith.constant 0 : i32
    %7 = arith.cmpi eq, %arg1, %c0_i32 : i32
    %8 = arith.extui %7 : i1 to i32
    %c0_i32_8 = arith.constant 0 : i32
    %9 = arith.cmpi ne, %8, %c0_i32_8 : i32
    scf.if %9 {
      %c0_109 = arith.constant 0 : index
      %c23_110 = arith.constant 23 : index
      %169 = vector.load %arg10[%c0_109, %c23_110] : memref<8x63xbf16, #tpu.memory_space<vmem>>, vector<8x1xbf16>
      %170 = vector.shape_cast %169 : vector<8x1xbf16> to vector<8x1xbf16>
      %171 = vector.broadcast %170 : vector<8x1xbf16> to vector<8x23xbf16>
      %c0_111 = arith.constant 0 : index
      %c0_112 = arith.constant 0 : index
      %172 = vector.load %arg10[%c0_111, %c0_112] : memref<8x63xbf16, #tpu.memory_space<vmem>>, vector<8x23xbf16>
      tpu.vector_store %arg10[%c0_111, %c0_112], %171 {strides = array<i32>} : memref<8x63xbf16, #tpu.memory_space<vmem>>, vector<8x23xbf16>,
    } else {
    }
    %c0_i32_9 = arith.constant 0 : i32
    %10 = arith.cmpi eq, %arg1, %c0_i32_9 : i32
    %11 = arith.extui %10 : i1 to i32
    %c0_i32_10 = arith.constant 0 : i32
    %12 = arith.cmpi ne, %11, %c0_i32_10 : i32
    scf.if %12 {
      %c0_109 = arith.constant 0 : index
      %c38 = arith.constant 38 : index
      %169 = vector.load %arg10[%c0_109, %c38] : memref<8x63xbf16, #tpu.memory_space<vmem>>, vector<8x1xbf16>
      %170 = vector.shape_cast %169 : vector<8x1xbf16> to vector<8x1xbf16>
      %171 = vector.broadcast %170 : vector<8x1xbf16> to vector<8x24xbf16>
      %c0_110 = arith.constant 0 : index
      %c39 = arith.constant 39 : index
      %172 = vector.load %arg10[%c0_110, %c39] : memref<8x63xbf16, #tpu.memory_space<vmem>>, vector<8x24xbf16>
      tpu.vector_store %arg10[%c0_110, %c39], %171 {strides = array<i32>} : memref<8x63xbf16, #tpu.memory_space<vmem>>, vector<8x24xbf16>,
    } else {
    }
    %c0_11 = arith.constant 0 : index
    %c8 = arith.constant 8 : index
    %13 = vector.load %arg10[%c0_11, %c8] : memref<8x63xbf16, #tpu.memory_space<vmem>>, vector<8x45xbf16>
    %c0_12 = arith.constant 0 : index
    %c10 = arith.constant 10 : index
    %14 = vector.load %arg10[%c0_12, %c10] : memref<8x63xbf16, #tpu.memory_space<vmem>>, vector<8x45xbf16>
    %15 = tpu.concatenate %13, %5, %14 in 0 : vector<8x45xbf16>, vector<8x45xbf16>, vector<8x45xbf16> -> vector<24x45xbf16>
    %c0_13 = arith.constant 0 : index
    %c0_14 = arith.constant 0 : index
    %c0_15 = arith.constant 0 : index
    %16 = vector.load %arg3[%c0_13, %c0_14, %c0_15] : memref<3x16x24xbf16, #tpu.memory_space<vmem>>, vector<1x16x24xbf16>
    %17 = vector.shape_cast %16 : vector<1x16x24xbf16> to vector<16x24xbf16>
    %cst_16 = arith.constant dense<0.000000e+00> : vector<16x45xf32>
    %18 = tpu.matmul %17, %15, %cst_16 {dimension_numbers = #tpu.dot_dimension_numbers<[1], [0], [0], [1], [0, 0, 1, 1], [], []>} : vector<16x24xbf16>, vector<24x45xbf16>, vector<16x45xf32> -> vector<16x45xf32>
    %c0_17 = arith.constant 0 : index
    %c0_18 = arith.constant 0 : index
    %c0_19 = arith.constant 0 : index
    %19 = vector.load %arg4[%c0_17, %c0_18, %c0_19] : memref<3x16x1xf32, #tpu.memory_space<vmem>>, vector<1x16x1xf32>
    %20 = vector.shape_cast %19 : vector<1x16x1xf32> to vector<16x1xf32>
    %21 = vector.broadcast %20 : vector<16x1xf32> to vector<16x45xf32>
    %22 = arith.addf %18, %21 : vector<16x45xf32>
    %23 = vector.extract_strided_slice %22 {offsets = [0, 0], sizes = [8, 45], strides = [1, 1]} : vector<16x45xf32> to vector<8x45xf32>
    %cst_20 = arith.constant 0.000000e+00 : f32
    %24 = vector.broadcast %cst_20 : f32 to vector<8x45xf32>
    %25 = arith.cmpf ogt, %23, %24 : vector<8x45xf32>
    %cst_21 = arith.constant 0.000000e+00 : f32
    %26 = vector.broadcast %cst_21 : f32 to vector<8x45xf32>
    %27 = arith.minimumf %23, %26 : vector<8x45xf32>
    %28 = math.exp %27 : vector<8x45xf32>
    %cst_22 = arith.constant 1.000000e+00 : f32
    %29 = vector.broadcast %cst_22 : f32 to vector<8x45xf32>
    %30 = arith.subf %28, %29 : vector<8x45xf32>
    %31 = arith.select %25, %23, %30 : vector<8x45xi1>, vector<8x45xf32>
    %c0_23 = arith.constant 0 : index
    %c0_24 = arith.constant 0 : index
    %c0_25 = arith.constant 0 : index
    %32 = vector.load %arg5[%c0_23, %c0_24, %c0_25] : memref<3x8x8xbf16, #tpu.memory_space<vmem>>, vector<1x8x8xbf16>
    %33 = vector.shape_cast %32 : vector<1x8x8xbf16> to vector<8x8xbf16>
    %34 = arith.truncf %31 : vector<8x45xf32> to vector<8x45xbf16>
    %cst_26 = arith.constant dense<0.000000e+00> : vector<8x45xf32>
    %35 = tpu.matmul %33, %34, %cst_26 {dimension_numbers = #tpu.dot_dimension_numbers<[1], [0], [0], [1], [0, 0, 1, 1], [], []>} : vector<8x8xbf16>, vector<8x45xbf16>, vector<8x45xf32> -> vector<8x45xf32>
    %c0_27 = arith.constant 0 : index
    %c0_28 = arith.constant 0 : index
    %c0_29 = arith.constant 0 : index
    %36 = vector.load %arg6[%c0_27, %c0_28, %c0_29] : memref<3x8x1xf32, #tpu.memory_space<vmem>>, vector<1x8x1xf32>
    %37 = vector.shape_cast %36 : vector<1x8x1xf32> to vector<8x1xf32>
    %38 = vector.broadcast %37 : vector<8x1xf32> to vector<8x45xf32>
    %39 = arith.addf %35, %38 : vector<8x45xf32>
    %cst_30 = arith.constant 0.000000e+00 : f32
    %40 = vector.broadcast %cst_30 : f32 to vector<8x45xf32>
    %41 = arith.cmpf ogt, %39, %40 : vector<8x45xf32>
    %cst_31 = arith.constant 0.000000e+00 : f32
    %42 = vector.broadcast %cst_31 : f32 to vector<8x45xf32>
    %43 = arith.minimumf %39, %42 : vector<8x45xf32>
    %44 = math.exp %43 : vector<8x45xf32>
    %cst_32 = arith.constant 1.000000e+00 : f32
    %45 = vector.broadcast %cst_32 : f32 to vector<8x45xf32>
    %46 = arith.subf %44, %45 : vector<8x45xf32>
    %47 = arith.select %41, %39, %46 : vector<8x45xi1>, vector<8x45xf32>
    %48 = vector.extract_strided_slice %22 {offsets = [8, 0], sizes = [8, 45], strides = [1, 1]} : vector<16x45xf32> to vector<8x45xf32>
    %49 = arith.addf %47, %48 : vector<8x45xf32>
    %50 = arith.truncf %49 : vector<8x45xf32> to vector<8x45xbf16>
    %c0_33 = arith.constant 0 : index
    %c9_34 = arith.constant 9 : index
    %51 = vector.load %arg10[%c0_33, %c9_34] : memref<8x63xbf16, #tpu.memory_space<vmem>>, vector<8x45xbf16>
    tpu.vector_store %arg10[%c0_33, %c9_34], %50 {strides = array<i32>} : memref<8x63xbf16, #tpu.memory_space<vmem>>, vector<8x45xbf16>,
    %c0_i32_35 = arith.constant 0 : i32
    %52 = arith.cmpi eq, %arg1, %c0_i32_35 : i32
    %53 = arith.extui %52 : i1 to i32
    %c0_i32_36 = arith.constant 0 : i32
    %54 = arith.cmpi ne, %53, %c0_i32_36 : i32
    scf.if %54 {
      %c0_109 = arith.constant 0 : index
      %c23_110 = arith.constant 23 : index
      %169 = vector.load %arg10[%c0_109, %c23_110] : memref<8x63xbf16, #tpu.memory_space<vmem>>, vector<8x1xbf16>
      %170 = vector.shape_cast %169 : vector<8x1xbf16> to vector<8x1xbf16>
      %171 = vector.broadcast %170 : vector<8x1xbf16> to vector<8x23xbf16>
      %c0_111 = arith.constant 0 : index
      %c0_112 = arith.constant 0 : index
      %172 = vector.load %arg10[%c0_111, %c0_112] : memref<8x63xbf16, #tpu.memory_space<vmem>>, vector<8x23xbf16>
      tpu.vector_store %arg10[%c0_111, %c0_112], %171 {strides = array<i32>} : memref<8x63xbf16, #tpu.memory_space<vmem>>, vector<8x23xbf16>,
    } else {
    }
    %c0_i32_37 = arith.constant 0 : i32
    %55 = arith.cmpi eq, %arg1, %c0_i32_37 : i32
    %56 = arith.extui %55 : i1 to i32
    %c0_i32_38 = arith.constant 0 : i32
    %57 = arith.cmpi ne, %56, %c0_i32_38 : i32
    scf.if %57 {
      %c0_109 = arith.constant 0 : index
      %c38 = arith.constant 38 : index
      %169 = vector.load %arg10[%c0_109, %c38] : memref<8x63xbf16, #tpu.memory_space<vmem>>, vector<8x1xbf16>
      %170 = vector.shape_cast %169 : vector<8x1xbf16> to vector<8x1xbf16>
      %171 = vector.broadcast %170 : vector<8x1xbf16> to vector<8x24xbf16>
      %c0_110 = arith.constant 0 : index
      %c39 = arith.constant 39 : index
      %172 = vector.load %arg10[%c0_110, %c39] : memref<8x63xbf16, #tpu.memory_space<vmem>>, vector<8x24xbf16>
      tpu.vector_store %arg10[%c0_110, %c39], %171 {strides = array<i32>} : memref<8x63xbf16, #tpu.memory_space<vmem>>, vector<8x24xbf16>,
    } else {
    }
    %c0_39 = arith.constant 0 : index
    %c6 = arith.constant 6 : index
    %58 = vector.load %arg10[%c0_39, %c6] : memref<8x63xbf16, #tpu.memory_space<vmem>>, vector<8x45xbf16>
    %c0_40 = arith.constant 0 : index
    %c12 = arith.constant 12 : index
    %59 = vector.load %arg10[%c0_40, %c12] : memref<8x63xbf16, #tpu.memory_space<vmem>>, vector<8x45xbf16>
    %60 = tpu.concatenate %58, %50, %59 in 0 : vector<8x45xbf16>, vector<8x45xbf16>, vector<8x45xbf16> -> vector<24x45xbf16>
    %c1 = arith.constant 1 : index
    %c0_41 = arith.constant 0 : index
    %c0_42 = arith.constant 0 : index
    %61 = vector.load %arg3[%c1, %c0_41, %c0_42] : memref<3x16x24xbf16, #tpu.memory_space<vmem>>, vector<1x16x24xbf16>
    %62 = vector.shape_cast %61 : vector<1x16x24xbf16> to vector<16x24xbf16>
    %cst_43 = arith.constant dense<0.000000e+00> : vector<16x45xf32>
    %63 = tpu.matmul %62, %60, %cst_43 {dimension_numbers = #tpu.dot_dimension_numbers<[1], [0], [0], [1], [0, 0, 1, 1], [], []>} : vector<16x24xbf16>, vector<24x45xbf16>, vector<16x45xf32> -> vector<16x45xf32>
    %c1_44 = arith.constant 1 : index
    %c0_45 = arith.constant 0 : index
    %c0_46 = arith.constant 0 : index
    %64 = vector.load %arg4[%c1_44, %c0_45, %c0_46] : memref<3x16x1xf32, #tpu.memory_space<vmem>>, vector<1x16x1xf32>
    %65 = vector.shape_cast %64 : vector<1x16x1xf32> to vector<16x1xf32>
    %66 = vector.broadcast %65 : vector<16x1xf32> to vector<16x45xf32>
    %67 = arith.addf %63, %66 : vector<16x45xf32>
    %68 = vector.extract_strided_slice %67 {offsets = [0, 0], sizes = [8, 45], strides = [1, 1]} : vector<16x45xf32> to vector<8x45xf32>
    %cst_47 = arith.constant 0.000000e+00 : f32
    %69 = vector.broadcast %cst_47 : f32 to vector<8x45xf32>
    %70 = arith.cmpf ogt, %68, %69 : vector<8x45xf32>
    %cst_48 = arith.constant 0.000000e+00 : f32
    %71 = vector.broadcast %cst_48 : f32 to vector<8x45xf32>
    %72 = arith.minimumf %68, %71 : vector<8x45xf32>
    %73 = math.exp %72 : vector<8x45xf32>
    %cst_49 = arith.constant 1.000000e+00 : f32
    %74 = vector.broadcast %cst_49 : f32 to vector<8x45xf32>
    %75 = arith.subf %73, %74 : vector<8x45xf32>
    %76 = arith.select %70, %68, %75 : vector<8x45xi1>, vector<8x45xf32>
    %c1_50 = arith.constant 1 : index
    %c0_51 = arith.constant 0 : index
    %c0_52 = arith.constant 0 : index
    %77 = vector.load %arg5[%c1_50, %c0_51, %c0_52] : memref<3x8x8xbf16, #tpu.memory_space<vmem>>, vector<1x8x8xbf16>
    %78 = vector.shape_cast %77 : vector<1x8x8xbf16> to vector<8x8xbf16>
    %79 = arith.truncf %76 : vector<8x45xf32> to vector<8x45xbf16>
    %cst_53 = arith.constant dense<0.000000e+00> : vector<8x45xf32>
    %80 = tpu.matmul %78, %79, %cst_53 {dimension_numbers = #tpu.dot_dimension_numbers<[1], [0], [0], [1], [0, 0, 1, 1], [], []>} : vector<8x8xbf16>, vector<8x45xbf16>, vector<8x45xf32> -> vector<8x45xf32>
    %c1_54 = arith.constant 1 : index
    %c0_55 = arith.constant 0 : index
    %c0_56 = arith.constant 0 : index
    %81 = vector.load %arg6[%c1_54, %c0_55, %c0_56] : memref<3x8x1xf32, #tpu.memory_space<vmem>>, vector<1x8x1xf32>
    %82 = vector.shape_cast %81 : vector<1x8x1xf32> to vector<8x1xf32>
    %83 = vector.broadcast %82 : vector<8x1xf32> to vector<8x45xf32>
    %84 = arith.addf %80, %83 : vector<8x45xf32>
    %cst_57 = arith.constant 0.000000e+00 : f32
    %85 = vector.broadcast %cst_57 : f32 to vector<8x45xf32>
    %86 = arith.cmpf ogt, %84, %85 : vector<8x45xf32>
    %cst_58 = arith.constant 0.000000e+00 : f32
    %87 = vector.broadcast %cst_58 : f32 to vector<8x45xf32>
    %88 = arith.minimumf %84, %87 : vector<8x45xf32>
    %89 = math.exp %88 : vector<8x45xf32>
    %cst_59 = arith.constant 1.000000e+00 : f32
    %90 = vector.broadcast %cst_59 : f32 to vector<8x45xf32>
    %91 = arith.subf %89, %90 : vector<8x45xf32>
    %92 = arith.select %86, %84, %91 : vector<8x45xi1>, vector<8x45xf32>
    %93 = vector.extract_strided_slice %67 {offsets = [8, 0], sizes = [8, 45], strides = [1, 1]} : vector<16x45xf32> to vector<8x45xf32>
    %94 = arith.addf %92, %93 : vector<8x45xf32>
    %95 = arith.truncf %94 : vector<8x45xf32> to vector<8x45xbf16>
    %c0_60 = arith.constant 0 : index
    %c9_61 = arith.constant 9 : index
    %96 = vector.load %arg10[%c0_60, %c9_61] : memref<8x63xbf16, #tpu.memory_space<vmem>>, vector<8x45xbf16>
    tpu.vector_store %arg10[%c0_60, %c9_61], %95 {strides = array<i32>} : memref<8x63xbf16, #tpu.memory_space<vmem>>, vector<8x45xbf16>,
    %c0_i32_62 = arith.constant 0 : i32
    %97 = arith.cmpi eq, %arg1, %c0_i32_62 : i32
    %98 = arith.extui %97 : i1 to i32
    %c0_i32_63 = arith.constant 0 : i32
    %99 = arith.cmpi ne, %98, %c0_i32_63 : i32
    scf.if %99 {
      %c0_109 = arith.constant 0 : index
      %c23_110 = arith.constant 23 : index
      %169 = vector.load %arg10[%c0_109, %c23_110] : memref<8x63xbf16, #tpu.memory_space<vmem>>, vector<8x1xbf16>
      %170 = vector.shape_cast %169 : vector<8x1xbf16> to vector<8x1xbf16>
      %171 = vector.broadcast %170 : vector<8x1xbf16> to vector<8x23xbf16>
      %c0_111 = arith.constant 0 : index
      %c0_112 = arith.constant 0 : index
      %172 = vector.load %arg10[%c0_111, %c0_112] : memref<8x63xbf16, #tpu.memory_space<vmem>>, vector<8x23xbf16>
      tpu.vector_store %arg10[%c0_111, %c0_112], %171 {strides = array<i32>} : memref<8x63xbf16, #tpu.memory_space<vmem>>, vector<8x23xbf16>,
    } else {
    }
    %c0_i32_64 = arith.constant 0 : i32
    %100 = arith.cmpi eq, %arg1, %c0_i32_64 : i32
    %101 = arith.extui %100 : i1 to i32
    %c0_i32_65 = arith.constant 0 : i32
    %102 = arith.cmpi ne, %101, %c0_i32_65 : i32
    scf.if %102 {
      %c0_109 = arith.constant 0 : index
      %c38 = arith.constant 38 : index
      %169 = vector.load %arg10[%c0_109, %c38] : memref<8x63xbf16, #tpu.memory_space<vmem>>, vector<8x1xbf16>
      %170 = vector.shape_cast %169 : vector<8x1xbf16> to vector<8x1xbf16>
      %171 = vector.broadcast %170 : vector<8x1xbf16> to vector<8x24xbf16>
      %c0_110 = arith.constant 0 : index
      %c39 = arith.constant 39 : index
      %172 = vector.load %arg10[%c0_110, %c39] : memref<8x63xbf16, #tpu.memory_space<vmem>>, vector<8x24xbf16>
      tpu.vector_store %arg10[%c0_110, %c39], %171 {strides = array<i32>} : memref<8x63xbf16, #tpu.memory_space<vmem>>, vector<8x24xbf16>,
    } else {
    }
    %c0_66 = arith.constant 0 : index
    %c0_67 = arith.constant 0 : index
    %103 = vector.load %arg10[%c0_66, %c0_67] : memref<8x63xbf16, #tpu.memory_space<vmem>>, vector<8x45xbf16>
    %c0_68 = arith.constant 0 : index
    %c18 = arith.constant 18 : index
    %104 = vector.load %arg10[%c0_68, %c18] : memref<8x63xbf16, #tpu.memory_space<vmem>>, vector<8x45xbf16>
    %105 = tpu.concatenate %103, %95, %104 in 0 : vector<8x45xbf16>, vector<8x45xbf16>, vector<8x45xbf16> -> vector<24x45xbf16>
    %c2 = arith.constant 2 : index
    %c0_69 = arith.constant 0 : index
    %c0_70 = arith.constant 0 : index
    %106 = vector.load %arg3[%c2, %c0_69, %c0_70] : memref<3x16x24xbf16, #tpu.memory_space<vmem>>, vector<1x16x24xbf16>
    %107 = vector.shape_cast %106 : vector<1x16x24xbf16> to vector<16x24xbf16>
    %cst_71 = arith.constant dense<0.000000e+00> : vector<16x45xf32>
    %108 = tpu.matmul %107, %105, %cst_71 {dimension_numbers = #tpu.dot_dimension_numbers<[1], [0], [0], [1], [0, 0, 1, 1], [], []>} : vector<16x24xbf16>, vector<24x45xbf16>, vector<16x45xf32> -> vector<16x45xf32>
    %c2_72 = arith.constant 2 : index
    %c0_73 = arith.constant 0 : index
    %c0_74 = arith.constant 0 : index
    %109 = vector.load %arg4[%c2_72, %c0_73, %c0_74] : memref<3x16x1xf32, #tpu.memory_space<vmem>>, vector<1x16x1xf32>
    %110 = vector.shape_cast %109 : vector<1x16x1xf32> to vector<16x1xf32>
    %111 = vector.broadcast %110 : vector<16x1xf32> to vector<16x45xf32>
    %112 = arith.addf %108, %111 : vector<16x45xf32>
    %113 = vector.extract_strided_slice %112 {offsets = [0, 0], sizes = [8, 45], strides = [1, 1]} : vector<16x45xf32> to vector<8x45xf32>
    %cst_75 = arith.constant 0.000000e+00 : f32
    %114 = vector.broadcast %cst_75 : f32 to vector<8x45xf32>
    %115 = arith.cmpf ogt, %113, %114 : vector<8x45xf32>
    %cst_76 = arith.constant 0.000000e+00 : f32
    %116 = vector.broadcast %cst_76 : f32 to vector<8x45xf32>
    %117 = arith.minimumf %113, %116 : vector<8x45xf32>
    %118 = math.exp %117 : vector<8x45xf32>
    %cst_77 = arith.constant 1.000000e+00 : f32
    %119 = vector.broadcast %cst_77 : f32 to vector<8x45xf32>
    %120 = arith.subf %118, %119 : vector<8x45xf32>
    %121 = arith.select %115, %113, %120 : vector<8x45xi1>, vector<8x45xf32>
    %c2_78 = arith.constant 2 : index
    %c0_79 = arith.constant 0 : index
    %c0_80 = arith.constant 0 : index
    %122 = vector.load %arg5[%c2_78, %c0_79, %c0_80] : memref<3x8x8xbf16, #tpu.memory_space<vmem>>, vector<1x8x8xbf16>
    %123 = vector.shape_cast %122 : vector<1x8x8xbf16> to vector<8x8xbf16>
    %124 = arith.truncf %121 : vector<8x45xf32> to vector<8x45xbf16>
    %cst_81 = arith.constant dense<0.000000e+00> : vector<8x45xf32>
    %125 = tpu.matmul %123, %124, %cst_81 {dimension_numbers = #tpu.dot_dimension_numbers<[1], [0], [0], [1], [0, 0, 1, 1], [], []>} : vector<8x8xbf16>, vector<8x45xbf16>, vector<8x45xf32> -> vector<8x45xf32>
    %c2_82 = arith.constant 2 : index
    %c0_83 = arith.constant 0 : index
    %c0_84 = arith.constant 0 : index
    %126 = vector.load %arg6[%c2_82, %c0_83, %c0_84] : memref<3x8x1xf32, #tpu.memory_space<vmem>>, vector<1x8x1xf32>
    %127 = vector.shape_cast %126 : vector<1x8x1xf32> to vector<8x1xf32>
    %128 = vector.broadcast %127 : vector<8x1xf32> to vector<8x45xf32>
    %129 = arith.addf %125, %128 : vector<8x45xf32>
    %cst_85 = arith.constant 0.000000e+00 : f32
    %130 = vector.broadcast %cst_85 : f32 to vector<8x45xf32>
    %131 = arith.cmpf ogt, %129, %130 : vector<8x45xf32>
    %cst_86 = arith.constant 0.000000e+00 : f32
    %132 = vector.broadcast %cst_86 : f32 to vector<8x45xf32>
    %133 = arith.minimumf %129, %132 : vector<8x45xf32>
    %134 = math.exp %133 : vector<8x45xf32>
    %cst_87 = arith.constant 1.000000e+00 : f32
    %135 = vector.broadcast %cst_87 : f32 to vector<8x45xf32>
    %136 = arith.subf %134, %135 : vector<8x45xf32>
    %137 = arith.select %131, %129, %136 : vector<8x45xi1>, vector<8x45xf32>
    %138 = vector.extract_strided_slice %112 {offsets = [8, 0], sizes = [8, 45], strides = [1, 1]} : vector<16x45xf32> to vector<8x45xf32>
    %139 = arith.addf %137, %138 : vector<8x45xf32>
    %140 = arith.truncf %139 : vector<8x45xf32> to vector<8x45xbf16>
    %c0_88 = arith.constant 0 : index
    %c9_89 = arith.constant 9 : index
    %141 = vector.load %arg10[%c0_88, %c9_89] : memref<8x63xbf16, #tpu.memory_space<vmem>>, vector<8x45xbf16>
    tpu.vector_store %arg10[%c0_88, %c9_89], %140 {strides = array<i32>} : memref<8x63xbf16, #tpu.memory_space<vmem>>, vector<8x45xbf16>,
    %c0_i32_90 = arith.constant 0 : i32
    %142 = arith.cmpi eq, %arg1, %c0_i32_90 : i32
    %143 = arith.extui %142 : i1 to i32
    %c0_i32_91 = arith.constant 0 : i32
    %144 = arith.cmpi ne, %143, %c0_i32_91 : i32
    scf.if %144 {
      %c0_109 = arith.constant 0 : index
      %c23_110 = arith.constant 23 : index
      %169 = vector.load %arg10[%c0_109, %c23_110] : memref<8x63xbf16, #tpu.memory_space<vmem>>, vector<8x1xbf16>
      %170 = vector.shape_cast %169 : vector<8x1xbf16> to vector<8x1xbf16>
      %171 = vector.broadcast %170 : vector<8x1xbf16> to vector<8x23xbf16>
      %c0_111 = arith.constant 0 : index
      %c0_112 = arith.constant 0 : index
      %172 = vector.load %arg10[%c0_111, %c0_112] : memref<8x63xbf16, #tpu.memory_space<vmem>>, vector<8x23xbf16>
      tpu.vector_store %arg10[%c0_111, %c0_112], %171 {strides = array<i32>} : memref<8x63xbf16, #tpu.memory_space<vmem>>, vector<8x23xbf16>,
    } else {
    }
    %c0_i32_92 = arith.constant 0 : i32
    %145 = arith.cmpi eq, %arg1, %c0_i32_92 : i32
    %146 = arith.extui %145 : i1 to i32
    %c0_i32_93 = arith.constant 0 : i32
    %147 = arith.cmpi ne, %146, %c0_i32_93 : i32
    scf.if %147 {
      %c0_109 = arith.constant 0 : index
      %c38 = arith.constant 38 : index
      %169 = vector.load %arg10[%c0_109, %c38] : memref<8x63xbf16, #tpu.memory_space<vmem>>, vector<8x1xbf16>
      %170 = vector.shape_cast %169 : vector<8x1xbf16> to vector<8x1xbf16>
      %171 = vector.broadcast %170 : vector<8x1xbf16> to vector<8x24xbf16>
      %c0_110 = arith.constant 0 : index
      %c39 = arith.constant 39 : index
      %172 = vector.load %arg10[%c0_110, %c39] : memref<8x63xbf16, #tpu.memory_space<vmem>>, vector<8x24xbf16>
      tpu.vector_store %arg10[%c0_110, %c39], %171 {strides = array<i32>} : memref<8x63xbf16, #tpu.memory_space<vmem>>, vector<8x24xbf16>,
    } else {
    }
    %c0_94 = arith.constant 0 : index
    %c22 = arith.constant 22 : index
    %148 = vector.load %arg10[%c0_94, %c22] : memref<8x63xbf16, #tpu.memory_space<vmem>>, vector<8x16xbf16>
    %c0_95 = arith.constant 0 : index
    %c23 = arith.constant 23 : index
    %149 = vector.load %arg10[%c0_95, %c23] : memref<8x63xbf16, #tpu.memory_space<vmem>>, vector<8x16xbf16>
    %c0_96 = arith.constant 0 : index
    %c24 = arith.constant 24 : index
    %150 = vector.load %arg10[%c0_96, %c24] : memref<8x63xbf16, #tpu.memory_space<vmem>>, vector<8x16xbf16>
    %c0_97 = arith.constant 0 : index
    %c25 = arith.constant 25 : index
    %151 = vector.load %arg10[%c0_97, %c25] : memref<8x63xbf16, #tpu.memory_space<vmem>>, vector<8x16xbf16>
    %152 = tpu.concatenate %148, %149, %150, %151 in 0 : vector<8x16xbf16>, vector<8x16xbf16>, vector<8x16xbf16>, vector<8x16xbf16> -> vector<32x16xbf16>
    %c0_98 = arith.constant 0 : index
    %c0_99 = arith.constant 0 : index
    %153 = vector.load %arg7[%c0_98, %c0_99] : memref<16x32xbf16, #tpu.memory_space<vmem>>, vector<16x32xbf16>
    %cst_100 = arith.constant dense<0.000000e+00> : vector<16x16xf32>
    %154 = tpu.matmul %153, %152, %cst_100 {dimension_numbers = #tpu.dot_dimension_numbers<[1], [0], [0], [1], [0, 0, 1, 1], [], []>} : vector<16x32xbf16>, vector<32x16xbf16>, vector<16x16xf32> -> vector<16x16xf32>
    %c0_101 = arith.constant 0 : index
    %c0_102 = arith.constant 0 : index
    %155 = vector.load %arg8[%c0_101, %c0_102] : memref<16x1xf32, #tpu.memory_space<vmem>>, vector<16x1xf32>
    %156 = vector.broadcast %155 : vector<16x1xf32> to vector<16x16xf32>
    %157 = arith.addf %154, %156 : vector<16x16xf32>
    %cst_103 = arith.constant 0.000000e+00 : f32
    %158 = vector.broadcast %cst_103 : f32 to vector<16x16xf32>
    %159 = arith.cmpf ogt, %157, %158 : vector<16x16xf32>
    %cst_104 = arith.constant 0.000000e+00 : f32
    %160 = vector.broadcast %cst_104 : f32 to vector<16x16xf32>
    %161 = arith.minimumf %157, %160 : vector<16x16xf32>
    %162 = math.exp %161 : vector<16x16xf32>
    %cst_105 = arith.constant 1.000000e+00 : f32
    %163 = vector.broadcast %cst_105 : f32 to vector<16x16xf32>
    %164 = arith.subf %162, %163 : vector<16x16xf32>
    %165 = arith.select %159, %157, %164 : vector<16x16xi1>, vector<16x16xf32>
    %c0_106 = arith.constant 0 : index
    %c0_107 = arith.constant 0 : index
    %c0_108 = arith.constant 0 : index
    %166 = vector.load %arg9[%c0_106, %c0_107, %c0_108] : memref<1x16x16xf32, #tpu.memory_space<vmem>>, vector<1x16x16xf32>
    %167 = vector.shape_cast %166 : vector<1x16x16xf32> to vector<16x16xf32>
    %168 = vector.shape_cast %165 : vector<16x16xf32> to vector<1x16x16xf32>
    tpu.vector_store %arg9[%c0_106, %c0_107, %c0_108], %168 {strides = array<i32>} : memref<1x16x16xf32, #tpu.memory_space<vmem>>, vector<1x16x16xf32>,
    return
  }
  func.func @transform_0(%arg0: i32, %arg1: i32) -> (i32, i32, i32, i32) {
    %c0_i32 = arith.constant 0 : i32
    %c0_i32_0 = arith.constant 0 : i32
    %c0_i32_1 = arith.constant 0 : i32
    return %arg0, %arg1, %c0_i32, %c0_i32_0 : i32, i32, i32, i32
  }
  func.func @transform_1(%arg0: i32, %arg1: i32) -> (i32, i32, i32) {
    %c0_i32 = arith.constant 0 : i32
    %c0_i32_0 = arith.constant 0 : i32
    %c0_i32_1 = arith.constant 0 : i32
    %c0_i32_2 = arith.constant 0 : i32
    return %c0_i32, %c0_i32_0, %c0_i32_1 : i32, i32, i32
  }
  func.func @transform_2(%arg0: i32, %arg1: i32) -> (i32, i32, i32) {
    %c0_i32 = arith.constant 0 : i32
    %c0_i32_0 = arith.constant 0 : i32
    %c0_i32_1 = arith.constant 0 : i32
    %c0_i32_2 = arith.constant 0 : i32
    return %c0_i32, %c0_i32_0, %c0_i32_1 : i32, i32, i32
  }
  func.func @transform_3(%arg0: i32, %arg1: i32) -> (i32, i32, i32) {
    %c0_i32 = arith.constant 0 : i32
    %c0_i32_0 = arith.constant 0 : i32
    %c0_i32_1 = arith.constant 0 : i32
    %c0_i32_2 = arith.constant 0 : i32
    return %c0_i32, %c0_i32_0, %c0_i32_1 : i32, i32, i32
  }
  func.func @transform_4(%arg0: i32, %arg1: i32) -> (i32, i32, i32) {
    %c0_i32 = arith.constant 0 : i32
    %c0_i32_0 = arith.constant 0 : i32
    %c0_i32_1 = arith.constant 0 : i32
    %c0_i32_2 = arith.constant 0 : i32
    return %c0_i32, %c0_i32_0, %c0_i32_1 : i32, i32, i32
  }
  func.func @transform_5(%arg0: i32, %arg1: i32) -> (i32, i32) {
    %c0_i32 = arith.constant 0 : i32
    %c0_i32_0 = arith.constant 0 : i32
    %c0_i32_1 = arith.constant 0 : i32
    return %c0_i32, %c0_i32_0 : i32, i32
  }
  func.func @transform_6(%arg0: i32, %arg1: i32) -> (i32, i32) {
    %c0_i32 = arith.constant 0 : i32
    %c0_i32_0 = arith.constant 0 : i32
    %c0_i32_1 = arith.constant 0 : i32
    return %c0_i32, %c0_i32_0 : i32, i32
  }
  func.func @transform_7(%arg0: i32, %arg1: i32) -> (i32, i32, i32) {
    %c0_i32 = arith.constant 0 : i32
    %c0_i32_0 = arith.constant 0 : i32
    return %arg0, %c0_i32, %arg1 : i32, i32, i32
  }
}

</mosaic_0001>

<llo_original>
// kernel: tpu_custom_call.1
$region0: #{tpu_custom_call.1}
  #allocation0 [shape = 'u32[]', space=smem, size = 0x4, offset = 0x4, fixed_abs, tag = 'smem constant byte address 0x4 - core index']
  #allocation1 [shape = 'u32[144,128]{1,0:T(1,128)}', space=vmem, size = 0x12000, scoped, tag = 'internal scratch']
  #allocation2 [shape = 'bf16[8,63]{1,0:T(8,128)(2,1)}', space=vmem, size = 0x800, scoped, tag = 'scratch operand']
  %s0 = inlined_call_operand.vmem [shape: bf16[2,1,8,45], index: 0, kind: input, shape index: {}]
  %s1 = inlined_call_operand.vmem [shape: bf16[3,16,24], index: 1, kind: input, shape index: {}]
  %s2 = inlined_call_operand.vmem [shape: f32[3,16,1], index: 2, kind: input, shape index: {}]
  %s3 = inlined_call_operand.vmem [shape: bf16[3,8,8], index: 3, kind: input, shape index: {}]
  %s4 = inlined_call_operand.vmem [shape: f32[3,8,1], index: 4, kind: input, shape index: {}]
  %s5 = inlined_call_operand.vmem [shape: bf16[16,32], index: 5, kind: input, shape index: {}]
  %s6 = inlined_call_operand.vmem [shape: f32[16,1], index: 6, kind: input, shape index: {}]
  %s7 = inlined_call_operand.hbm [shape: f32[2,16,16], index: 7, kind: output, shape index: {}]
  %s8 = sld [smem:[#allocation0]]
  $region77: #{tpu_custom_call.1} parent=0
    _
  %s10 = ssub.s32 1, %s8
  %s11 = scalar_select 0, %s10, %s8
  $region1: #{tpu_custom_call.1} parent=0
    #allocation3 [shape = 'u8[16384]{0}', space=vmem, size = 0x4000, scoped, tag = 'output window, operand 0']
    #allocation4 [shape = 's32[2]{0}', space=sflag, size = 0x8, scoped, tag = 'scoped memory for tpu_custom_call.1']
    %12 = vsyncpa [#allocation4], 0
    %s13 = scalar_lea.sflag [#allocation4], 1
    %14 = vsyncpa %s13, 0
    loop: start=0, step=1, limit=4
    $region2: #{tpu_custom_call.1} parent=1 // loop_pre_header
      _
    $region3: #{tpu_custom_call.1} parent=1 // loop_header
      %s16 = sphi 0, %s20
      %p17 = scmp.ge.s32.totalorder %s16, 4
      %s23 = sphi 0, %s35
      %s24 = sphi 0, %s31
      %s25 = sphi 0, %s23
      %s26 = sphi 0, %s24
      %s27 = sphi 0, %s25
      %s28 = sphi 0, %s26
      %s40 = sphi 0, %s42
      %s43 = sphi 0, %s40
      %s44 = sphi 0, %s43
      %s60 = sphi 0, %s44
      %s64 = sphi 0, %s64
      %s66 = sphi 0, %s64
      %s67 = sphi 0, %s66
      %s81 = sphi 0, %s67
      %s85 = sphi 0, %s85
      %s87 = sphi 0, %s85
      %s88 = sphi 0, %s87
      %s102 = sphi 0, %s88
      %s106 = sphi 0, %s106
      %s108 = sphi 0, %s106
      %s109 = sphi 0, %s108
      %s123 = sphi 0, %s109
      %s127 = sphi 0, %s127
      %s129 = sphi 0, %s127
      %s130 = sphi 0, %s129
      %s144 = sphi 0, %s130
      %s148 = sphi 0, %s148
      %s150 = sphi 0, %s148
      %s151 = sphi 0, %s150
      %s165 = sphi 0, %s151
      %s169 = sphi 0, %s169
      %s171 = sphi 0, %s169
      %s172 = sphi 0, %s171
      %s186 = sphi 0, %s172
      %s194 = sphi 0, %s196
      %s197 = sphi 0, %s194
      %s198 = sphi 0, %s197
      %s214 = sphi 0, %s198
    $region4: #{tpu_custom_call.1} parent=1 // loop_header_branch
      %19 = sbr.rel (%p17) target = $region8
    $region5: #{tpu_custom_call.1} parent=1 // loop_body
      %s21 = ssub.s32 %s16, 1
      %s22 = ssub.s32 %s16, 2
      %s29 = sadd.s32 1, %s24
      %p30 = scmp.ge.s32.totalorder %s29, 1
      %s31 = scalar_select %p30, 0, %s29
      %s32 = sadd.s32 1, %s23
      %s33 = scalar_select %p30, %s32, %s23
      %p34 = scmp.ge.s32.totalorder %s33, 2
      %s35 = scalar_select %p34, 0, %s33
      %s36 = ssub.s32 %s23, %s35
      %s37 = ssub.s32 %s24, %s31
      %s38 = sor.u32 %s36, %s37
      %p39 = scmp.eq.s32.totalorder %s38, 0
      %s41 = sadd.s32 %s40, 1
      %s42 = scalar_select %p39, %s40, %s41
      %p45 = pneg %p39
      %p46 = scmp.eq.s32.totalorder %s16, 1
      %p47 = por %p45, %p46
      %p48 = scmp.ne.s32.totalorder %s40, %s43
      %p49 = scmp.eq.s32.totalorder %s16, 0
      %p50 = por %p48, %p49
      %p51 = scmp.ne.s32.totalorder %s40, %s43
      %p52 = scmp.eq.s32.totalorder %s21, 1
      %p53 = por %p51, %p52
      %p54 = scmp.ne.s32.totalorder %s43, %s44
      %p55 = scmp.eq.s32.totalorder %s21, 0
      %p56 = por %p54, %p55
      %p57 = scmp.ne.s32.totalorder %s43, %s44
      %p58 = scmp.eq.s32.totalorder %s22, 1
      %p59 = por %p57, %p58
      %p61 = scmp.ne.s32.totalorder %s44, %s60
      %p62 = scmp.eq.s32.totalorder %s22, 0
      %p63 = por %p61, %p62
      %s65 = sadd.s32 %s64, 1
      %p68 = scmp.eq.s32.totalorder %s16, 1
      %p69 = scmp.ne.s32.totalorder %s64, %s66
      %p70 = scmp.eq.s32.totalorder %s16, 0
      %p71 = por %p69, %p70
      %p72 = scmp.ne.s32.totalorder %s64, %s66
      %p73 = scmp.eq.s32.totalorder %s21, 1
      %p74 = por %p72, %p73
      %p75 = scmp.ne.s32.totalorder %s66, %s67
      %p76 = scmp.eq.s32.totalorder %s21, 0
      %p77 = por %p75, %p76
      %p78 = scmp.ne.s32.totalorder %s66, %s67
      %p79 = scmp.eq.s32.totalorder %s22, 1
      %p80 = por %p78, %p79
      %p82 = scmp.ne.s32.totalorder %s67, %s81
      %p83 = scmp.eq.s32.totalorder %s22, 0
      %p84 = por %p82, %p83
      %s86 = sadd.s32 %s85, 1
      %p89 = scmp.eq.s32.totalorder %s16, 1
      %p90 = scmp.ne.s32.totalorder %s85, %s87
      %p91 = scmp.eq.s32.totalorder %s16, 0
      %p92 = por %p90, %p91
      %p93 = scmp.ne.s32.totalorder %s85, %s87
      %p94 = scmp.eq.s32.totalorder %s21, 1
      %p95 = por %p93, %p94
      %p96 = scmp.ne.s32.totalorder %s87, %s88
      %p97 = scmp.eq.s32.totalorder %s21, 0
      %p98 = por %p96, %p97
      %p99 = scmp.ne.s32.totalorder %s87, %s88
      %p100 = scmp.eq.s32.totalorder %s22, 1
      %p101 = por %p99, %p100
      %p103 = scmp.ne.s32.totalorder %s88, %s102
      %p104 = scmp.eq.s32.totalorder %s22, 0
      %p105 = por %p103, %p104
      %s107 = sadd.s32 %s106, 1
      %p110 = scmp.eq.s32.totalorder %s16, 1
      %p111 = scmp.ne.s32.totalorder %s106, %s108
      %p112 = scmp.eq.s32.totalorder %s16, 0
      %p113 = por %p111, %p112
      %p114 = scmp.ne.s32.totalorder %s106, %s108
      %p115 = scmp.eq.s32.totalorder %s21, 1
      %p116 = por %p114, %p115
      %p117 = scmp.ne.s32.totalorder %s108, %s109
      %p118 = scmp.eq.s32.totalorder %s21, 0
      %p119 = por %p117, %p118
      %p120 = scmp.ne.s32.totalorder %s108, %s109
      %p121 = scmp.eq.s32.totalorder %s22, 1
      %p122 = por %p120, %p121
      %p124 = scmp.ne.s32.totalorder %s109, %s123
      %p125 = scmp.eq.s32.totalorder %s22, 0
      %p126 = por %p124, %p125
      %s128 = sadd.s32 %s127, 1
      %p131 = scmp.eq.s32.totalorder %s16, 1
      %p132 = scmp.ne.s32.totalorder %s127, %s129
      %p133 = scmp.eq.s32.totalorder %s16, 0
      %p134 = por %p132, %p133
      %p135 = scmp.ne.s32.totalorder %s127, %s129
      %p136 = scmp.eq.s32.totalorder %s21, 1
      %p137 = por %p135, %p136
      %p138 = scmp.ne.s32.totalorder %s129, %s130
      %p139 = scmp.eq.s32.totalorder %s21, 0
      %p140 = por %p138, %p139
      %p141 = scmp.ne.s32.totalorder %s129, %s130
      %p142 = scmp.eq.s32.totalorder %s22, 1
      %p143 = por %p141, %p142
      %p145 = scmp.ne.s32.totalorder %s130, %s144
      %p146 = scmp.eq.s32.totalorder %s22, 0
      %p147 = por %p145, %p146
      %s149 = sadd.s32 %s148, 1
      %p152 = scmp.eq.s32.totalorder %s16, 1
      %p153 = scmp.ne.s32.totalorder %s148, %s150
      %p154 = scmp.eq.s32.totalorder %s16, 0
      %p155 = por %p153, %p154
      %p156 = scmp.ne.s32.totalorder %s148, %s150
      %p157 = scmp.eq.s32.totalorder %s21, 1
      %p158 = por %p156, %p157
      %p159 = scmp.ne.s32.totalorder %s150, %s151
      %p160 = scmp.eq.s32.totalorder %s21, 0
      %p161 = por %p159, %p160
      %p162 = scmp.ne.s32.totalorder %s150, %s151
      %p163 = scmp.eq.s32.totalorder %s22, 1
      %p164 = por %p162, %p163
      %p166 = scmp.ne.s32.totalorder %s151, %s165
      %p167 = scmp.eq.s32.totalorder %s22, 0
      %p168 = por %p166, %p167
      %s170 = sadd.s32 %s169, 1
      %p173 = scmp.eq.s32.totalorder %s16, 1
      %p174 = scmp.ne.s32.totalorder %s169, %s171
      %p175 = scmp.eq.s32.totalorder %s16, 0
      %p176 = por %p174, %p175
      %p177 = scmp.ne.s32.totalorder %s169, %s171
      %p178 = scmp.eq.s32.totalorder %s21, 1
      %p179 = por %p177, %p178
      %p180 = scmp.ne.s32.totalorder %s171, %s172
      %p181 = scmp.eq.s32.totalorder %s21, 0
      %p182 = por %p180, %p181
      %p183 = scmp.ne.s32.totalorder %s171, %s172
      %p184 = scmp.eq.s32.totalorder %s22, 1
      %p185 = por %p183, %p184
      %p187 = scmp.ne.s32.totalorder %s172, %s186
      %p188 = scmp.eq.s32.totalorder %s22, 0
      %p189 = por %p187, %p188
      %s190 = ssub.s32 %s23, %s35
      %s191 = ssub.s32 %s24, %s31
      %s192 = sor.u32 %s190, %s191
      %p193 = scmp.eq.s32.totalorder %s192, 0
      %s195 = sadd.s32 %s194, 1
      %s196 = scalar_select %p193, %s194, %s195
      %p199 = pneg %p193
      %p200 = scmp.eq.s32.totalorder %s16, 1
      %p201 = por %p199, %p200
      %p202 = scmp.ne.s32.totalorder %s194, %s197
      %p203 = scmp.eq.s32.totalorder %s16, 0
      %p204 = por %p202, %p203
      %p205 = scmp.ne.s32.totalorder %s194, %s197
      %p206 = scmp.eq.s32.totalorder %s21, 1
      %p207 = por %p205, %p206
      %p208 = scmp.ne.s32.totalorder %s197, %s198
      %p209 = scmp.eq.s32.totalorder %s21, 0
      %p210 = por %p208, %p209
      %p211 = scmp.ne.s32.totalorder %s197, %s198
      %p212 = scmp.eq.s32.totalorder %s22, 1
      %p213 = por %p211, %p212
      %p215 = scmp.ne.s32.totalorder %s198, %s214
      %p216 = scmp.eq.s32.totalorder %s22, 0
      %p217 = por %p215, %p216
      %p218 = scmp.le.s32.totalorder 1, %s16
      %p219 = scmp.lt.s32.totalorder %s16, 3
      %p220 = pnand %p218, %p219
      %p221 = pneg %p220
      // Predicated region
      $region9: #{tpu_custom_call.1} parent=5 // pred_check
        _
      $region10: #{tpu_custom_call.1} parent=5 // pred_check_branch
        %223 = sbr.rel (%p220) target = $region12
      $region11: #{tpu_custom_call.1} parent=5 // pred_region
        %s224 = ssub.s32 %s16, 1
        // Predicated region
        $region13: #{tpu_custom_call.1} parent=11 // pred_check
          %p225 = pneg %p77
        $region14: #{tpu_custom_call.1} parent=11 // pred_check_branch
          %227 = sbr.rel (%p225) target = $region16
        $region15: #{tpu_custom_call.1} parent=11 // pred_region
          _
        $region16: #{tpu_custom_call.1} parent=11 // pred_fallthru
          _
        // Predicated region
        $region17: #{tpu_custom_call.1} parent=11 // pred_check
          %p228 = pneg %p98
        $region18: #{tpu_custom_call.1} parent=11 // pred_check_branch
          %230 = sbr.rel (%p228) target = $region20
        $region19: #{tpu_custom_call.1} parent=11 // pred_region
          _
        $region20: #{tpu_custom_call.1} parent=11 // pred_fallthru
          _
        // Predicated region
        $region21: #{tpu_custom_call.1} parent=11 // pred_check
          %p231 = pneg %p119
        $region22: #{tpu_custom_call.1} parent=11 // pred_check_branch
          %233 = sbr.rel (%p231) target = $region24
        $region23: #{tpu_custom_call.1} parent=11 // pred_region
          _
        $region24: #{tpu_custom_call.1} parent=11 // pred_fallthru
          _
        // Predicated region
        $region25: #{tpu_custom_call.1} parent=11 // pred_check
          %p234 = pneg %p140
        $region26: #{tpu_custom_call.1} parent=11 // pred_check_branch
          %236 = sbr.rel (%p234) target = $region28
        $region27: #{tpu_custom_call.1} parent=11 // pred_region
          _
        $region28: #{tpu_custom_call.1} parent=11 // pred_fallthru
          _
        // Predicated region
        $region29: #{tpu_custom_call.1} parent=11 // pred_check
          %p237 = pneg %p161
        $region30: #{tpu_custom_call.1} parent=11 // pred_check_branch
          %239 = sbr.rel (%p237) target = $region32
        $region31: #{tpu_custom_call.1} parent=11 // pred_region
          _
        $region32: #{tpu_custom_call.1} parent=11 // pred_fallthru
          _
        // Predicated region
        $region33: #{tpu_custom_call.1} parent=11 // pred_check
          %p240 = pneg %p182
        $region34: #{tpu_custom_call.1} parent=11 // pred_check_branch
          %242 = sbr.rel (%p240) target = $region36
        $region35: #{tpu_custom_call.1} parent=11 // pred_region
          _
        $region36: #{tpu_custom_call.1} parent=11 // pred_fallthru
          _
      $region12: #{tpu_custom_call.1} parent=5 // pred_fallthru
        _
      %p243 = scmp.lt.s32.totalorder %s16, 2
      // Predicated region
      $region37: #{tpu_custom_call.1} parent=5 // pred_check
        %p244 = pneg %p243
      $region38: #{tpu_custom_call.1} parent=5 // pred_check_branch
        %246 = sbr.rel (%p244) target = $region40
      $region39: #{tpu_custom_call.1} parent=5 // pred_region
        // Predicated region
        $region41: #{tpu_custom_call.1} parent=39 // pred_check
          %p247 = pneg %p50
        $region42: #{tpu_custom_call.1} parent=39 // pred_check_branch
          %249 = sbr.rel (%p247) target = $region44
        $region43: #{tpu_custom_call.1} parent=39 // pred_region
          %p250 = scmp.lt.s32.totalorder %s23, 1
          %s251 = scalar_select %p250, %s23, 1
          %p252 = scmp.lt.s32.totalorder %s24, 0
          %s253 = scalar_select %p252, %s24, 0
          %s254 = sadd.s32 %s253, %s251
          %s255 = smul.addr %s254, 4
          %s256 = scalar_lea.vmem %s0, %s255
        $region44: #{tpu_custom_call.1} parent=39 // pred_fallthru
          _
      $region40: #{tpu_custom_call.1} parent=5 // pred_fallthru
        _
      %p257 = scmp.le.s32.totalorder 1, %s16
      %p258 = scmp.lt.s32.totalorder %s16, 3
      %p259 = pnand %p257, %p258
      %p260 = pneg %p259
      // Predicated region
      $region45: #{tpu_custom_call.1} parent=5 // pred_check
        _
      $region46: #{tpu_custom_call.1} parent=5 // pred_check_branch
        %262 = sbr.rel (%p259) target = $region48
      $region47: #{tpu_custom_call.1} parent=5 // pred_region
        %s263 = ssub.s32 %s16, 1
        %p264 = scmp.lt.s32.totalorder %s25, 1
        %s265 = scalar_select %p264, %s25, 1
        %p266 = scmp.lt.s32.totalorder %s26, 0
        %s267 = scalar_select %p266, %s26, 0
        %s268 = sadd.s32 %s267, %s265
        %s269 = smul.addr %s268, 4
        %s270 = scalar_lea.vmem %s0, %s269
        %p271 = pneg %p56
        %p272 = pneg %p53
        %p273 = pneg %p77
        %p274 = pneg %p74
        %p275 = pneg %p98
        %p276 = pneg %p95
        %p277 = pneg %p119
        %p278 = pneg %p116
        %p279 = pneg %p140
        %p280 = pneg %p137
        %p281 = pneg %p161
        %p282 = pneg %p158
        %p283 = pneg %p182
        %p284 = pneg %p179
        %p285 = pneg %p210
        %p286 = pneg %p207
        %s287 = sand.u32 %s197, 1
        %s288 = scalar_lea.sflag [#allocation4], %s287
        %s289 = sand.u32 %s197, 1
        %s290 = smul.addr %s289, 16
        %s291 = scalar_lea.vmem [#allocation3], %s290
        %p292 = scmp.lt.s32.totalorder %s25, 1
        %s293 = scalar_select %p292, %s25, 1
        %p294 = scmp.lt.s32.totalorder %s26, 0
        %s295 = scalar_select %p294, %s26, 0
        %s296 = sadd.s32 %s295, %s293
        %s297 = smul.addr %s296, 4
        %s298 = scalar_lea.vmem %s0, %s297
        %vm300 = vcmask 68608
        %301 = vst.msk [vmem:[#allocation2] sm:$0xf] %vm300, 0
        %vm302 = vcmask 511408
        %303 = vst.msk [vmem:[#allocation2] sm:$0xf] %vm302, 0
        %v304 = vld [vmem:[%s298] sm:$0xf]
        %306 = vrot.lane.b32.xlu0 %v304, 9
        %v307 = vpop.permute.xlu0 %306
        %vm309 = vcmask 437320
        %310 = vst.msk [vmem:[#allocation2] sm:$0xf] %vm309, %v307
        %p311 = scmp.eq.s32.totalorder %s26, 0
        // Predicated region
        $region49: #{tpu_custom_call.1} parent=47 // pred_check
          %p312 = pneg %p311
        $region50: #{tpu_custom_call.1} parent=47 // pred_check_branch
          %314 = sbr.rel (%p312) target = $region52
        $region51: #{tpu_custom_call.1} parent=47 // pred_region
          %v315 = vld [vmem:[#allocation2] sm:$0xf]
          %317 = vset.pattern.permute.xlu0 23
          %318 = vperm.xlu0 %317, %v315
          %v319 = vpop.permute.xlu0 %318
          %v322 = vunpack.c.l.s4 839922192
          %v323 = vunpack.c.0.s8 %v322
          %v324 = vlaneseq
          %v325 = vshrl.u32 %v324, 7
          %v326 = vsub.s32 %v323, %v325
          %v327 = vrot.slane %v319, %v326
          %vm328 = vcmask 183296
          %329 = vst.msk [vmem:[#allocation2] sm:$0xf] %vm328, %v327
          %v330 = vld [vmem:[#allocation2] sm:$0xf]
          %332 = vset.pattern.permute.xlu0 38
          %333 = vperm.xlu0 %332, %v330
          %v334 = vpop.permute.xlu0 %333
          %v337 = vunpack.c.l.s4 839922192
          %v338 = vunpack.c.0.s8 %v337
          %v339 = vlaneseq
          %v340 = vshrl.u32 %v339, 7
          %v341 = vsub.s32 %v338, %v340
          %v342 = vrot.slane %v334, %v341
          %vm343 = vcmask 511288
          %344 = vst.msk [vmem:[#allocation2] sm:$0xf] %vm343, %v342
        $region52: #{tpu_custom_call.1} parent=47 // pred_fallthru
          _
        %v345 = vld [vmem:[#allocation2] sm:$0xf]
        %v346 = vunpack.c.l.b16 %v304
        %v347 = vpack.c.b16 %v346, %v346
        %348 = vrot.lane.b32.xlu0 %v347, 8
        %v349 = vpop.permute.xlu0 %348
        %v351 = vunpack.c.l.b16 %v345
        %v352 = vpack.c.b16 %v351, %v351
        %353 = vrot.lane.b32.xlu0 %v352, 126
        %v354 = vpop.permute.xlu0 %353
        %vm355 = vcmask 1043456
        %v358 = vsel %vm355, %v345, %v349
        %v359 = vld [vmem:[%s1] sm:$0xf]
        %v360 = vld [vmem:[%s1 + $0x4] sm:$0xf]
        %v361 = vld [vmem:[%s2] sm:$0xff]
        %v362 = vld [vmem:[%s2 + $0x8] sm:$0xff]
        %364 = vset.pattern.permute.xlu0 0
        %365 = vperm.xlu0 %364, %v361
        %v366 = vpop.permute.xlu0 %365
        %369 = vset.pattern.permute.xlu0 0
        %370 = vperm.xlu0 %369, %v362
        %v371 = vpop.permute.xlu0 %370
        %v375 = vunpack.c.l.b16 %v359
        %v376 = vunpack.c.l.b16 %v360
        %v377 = vpack.c.b16 %v376, %v375
        %379 = vrot.lane.b32.xlu0 %v358, 120
        %v380 = vpop.permute.xlu0 %379
        %381 = vrot.lane.b32.xlu0 %v354, 120
        %v382 = vpop.permute.xlu0 %381
        %vm384 = vcmask 195584
        %v386 = vsel %vm384, %v377, 0
        %v389 = vsel %vm355, %v382, 0
        %391 = vmatprep.subr.bf16.mxu0 0
        %392 = vmatpush1.bf16.msra.mxu0 0
        %393 = vmatprep.subr.bf16.mxu0 0
        %394 = vmatpush1.bf16.msra.mxu0 0
        %395 = vmatprep.subr.bf16.mxu0 0
        %396 = vmatpush1.bf16.msra.mxu0 0
        %397 = vmatprep.subr.bf16.mxu0 0
        %398 = vmatpush1.bf16.msra.mxu0 0
        %399 = vmatprep.subr.bf16.mxu0 0
        %400 = vmatpush1.bf16.msra.mxu0 0
        %401 = vmatprep.subr.bf16.mxu0 0
        %402 = vmatpush1.bf16.msra.mxu0 0
        %403 = vmatprep.subr.bf16.mxu0 0
        %404 = vmatpush1.bf16.msra.mxu0 %v389
        %405 = vmatprep.subr.bf16.mxu0 0
        %406 = vmatpush1.bf16.msra.mxu0 %v380
        %407 = vmatprep.subr.bf16.mxu0 0
        %408 = vmatpush2.bf16.msra.mxu0 0
        %409 = vmatprep.subr.bf16.mxu0 0
        %410 = vmatpush2.bf16.msra.mxu0 0
        %411 = vmatprep.subr.bf16.mxu0 0
        %412 = vmatpush2.bf16.msra.mxu0 0
        %413 = vmatprep.subr.bf16.mxu0 0
        %414 = vmatpush2.bf16.msra.mxu0 0
        %415 = vmatprep.subr.bf16.mxu0 0
        %416 = vmatpush2.bf16.msra.mxu0 0
        %417 = vmatprep.subr.bf16.mxu0 0
        %418 = vmatpush2.bf16.msra.mxu0 0
        %419 = vmatprep.subr.bf16.mxu0 0
        %420 = vmatpush2.bf16.msra.mxu0 0
        %421 = vmatprep.subr.bf16.mxu0 0
        %422 = vmatpush2.bf16.msra.mxu0 0
        %423 = vmatprep.mubr.bf16.mxu0 0
        %424 = vmatmul.mubr.bf16.gmra.mxu0 %v386
        %v425 = vpop.f32.mrf.mxu0
        %v426 = vadd.f32 %v366, %v425
        %v427 = vpop.f32.mrf.mxu0
        %v428 = vpop.f32.mrf.mxu0
        %v429 = vadd.f32 %v371, %v428
        %v430 = vpop.f32.mrf.mxu0
        %431 = vdwg.mxu0
        %vm432 = vcmp.gt.f32.partialorder %v426, 0.0
        %v433 = vmin.f32 %v426, 0.0
        %v434 = vmul.f32 %v433, 1.442695
        %v435 = vpow.pop %v434
        %v436 = vsub.f32 %v435, 1.0
        %v437 = vsel %vm432, %v426, %v436
        %v438 = vld [vmem:[%s3] sm:$0xf]
        %v439 = vpack.c.bf16 %v437, %v437
        %v440 = vld [vmem:[%s4] sm:$0xff]
        %442 = vset.pattern.permute.xlu0 0
        %443 = vperm.xlu0 %442, %v440
        %v444 = vpop.permute.xlu0 %443
        %vm446 = vcmask 64512
        %v448 = vsel %vm446, %v438, 0
        %v451 = vsel %vm355, %v439, 0
        %453 = vmatprep.subr.bf16.mxu0 0
        %454 = vmatpush1.bf16.msra.mxu0 0
        %455 = vmatprep.subr.bf16.mxu0 0
        %456 = vmatpush1.bf16.msra.mxu0 0
        %457 = vmatprep.subr.bf16.mxu0 0
        %458 = vmatpush1.bf16.msra.mxu0 0
        %459 = vmatprep.subr.bf16.mxu0 0
        %460 = vmatpush1.bf16.msra.mxu0 0
        %461 = vmatprep.subr.bf16.mxu0 0
        %462 = vmatpush1.bf16.msra.mxu0 0
        %463 = vmatprep.subr.bf16.mxu0 0
        %464 = vmatpush1.bf16.msra.mxu0 0
        %465 = vmatprep.subr.bf16.mxu0 0
        %466 = vmatpush1.bf16.msra.mxu0 0
        %467 = vmatprep.subr.bf16.mxu0 0
        %468 = vmatpush1.bf16.msra.mxu0 %v451
        %469 = vmatprep.subr.bf16.mxu0 0
        %470 = vmatpush2.bf16.msra.mxu0 0
        %471 = vmatprep.subr.bf16.mxu0 0
        %472 = vmatpush2.bf16.msra.mxu0 0
        %473 = vmatprep.subr.bf16.mxu0 0
        %474 = vmatpush2.bf16.msra.mxu0 0
        %475 = vmatprep.subr.bf16.mxu0 0
        %476 = vmatpush2.bf16.msra.mxu0 0
        %477 = vmatprep.subr.bf16.mxu0 0
        %478 = vmatpush2.bf16.msra.mxu0 0
        %479 = vmatprep.subr.bf16.mxu0 0
        %480 = vmatpush2.bf16.msra.mxu0 0
        %481 = vmatprep.subr.bf16.mxu0 0
        %482 = vmatpush2.bf16.msra.mxu0 0
        %483 = vmatprep.subr.bf16.mxu0 0
        %484 = vmatpush2.bf16.msra.mxu0 0
        %485 = vmatprep.mubr.bf16.mxu0 0
        %486 = vmatmul.mubr.bf16.gmra.mxu0 %v448
        %v487 = vpop.f32.mrf.mxu0
        %v488 = vadd.f32 %v444, %v487
        %v489 = vpop.f32.mrf.mxu0
        %v490 = vpop.f32.mrf.mxu0
        %v491 = vpop.f32.mrf.mxu0
        %492 = vdwg.mxu0
        %vm493 = vcmp.gt.f32.partialorder %v488, 0.0
        %v494 = vmin.f32 %v488, 0.0
        %v495 = vmul.f32 %v494, 1.442695
        %v496 = vpow.pop %v495
        %v497 = vsub.f32 %v496, 1.0
        %v498 = vsel %vm493, %v488, %v497
        %v499 = vadd.f32 %v498, %v429
        %v500 = vpack.c.bf16 %v499, %v499
        %v502 = vunpack.c.l.b16 %v500
        %v503 = vpack.c.b16 %v502, %v502
        %504 = vrot.lane.b32.xlu0 %v503, 9
        %v505 = vpop.permute.xlu0 %504
        %507 = vst.msk [vmem:[#allocation2] sm:$0xf] %vm309, %v505
        // Predicated region
        $region53: #{tpu_custom_call.1} parent=47 // pred_check
          %p508 = pneg %p311
        $region54: #{tpu_custom_call.1} parent=47 // pred_check_branch
          %510 = sbr.rel (%p508) target = $region56
        $region55: #{tpu_custom_call.1} parent=47 // pred_region
          %v511 = vld [vmem:[#allocation2] sm:$0xf]
          %513 = vset.pattern.permute.xlu0 23
          %514 = vperm.xlu0 %513, %v511
          %v515 = vpop.permute.xlu0 %514
          %v518 = vunpack.c.l.s4 839922192
          %v519 = vunpack.c.0.s8 %v518
          %v520 = vlaneseq
          %v521 = vshrl.u32 %v520, 7
          %v522 = vsub.s32 %v519, %v521
          %v523 = vrot.slane %v515, %v522
          %vm524 = vcmask 183296
          %525 = vst.msk [vmem:[#allocation2] sm:$0xf] %vm524, %v523
          %v526 = vld [vmem:[#allocation2] sm:$0xf]
          %528 = vset.pattern.permute.xlu0 38
          %529 = vperm.xlu0 %528, %v526
          %v530 = vpop.permute.xlu0 %529
          %v533 = vunpack.c.l.s4 839922192
          %v534 = vunpack.c.0.s8 %v533
          %v535 = vlaneseq
          %v536 = vshrl.u32 %v535, 7
          %v537 = vsub.s32 %v534, %v536
          %v538 = vrot.slane %v530, %v537
          %vm539 = vcmask 511288
          %540 = vst.msk [vmem:[#allocation2] sm:$0xf] %vm539, %v538
        $region56: #{tpu_custom_call.1} parent=47 // pred_fallthru
          _
        %v541 = vld [vmem:[#allocation2] sm:$0xf]
        %v542 = vrot.slane %v500, 4
        %543 = vrot.lane.b32.xlu0 %v542, 6
        %v544 = vpop.permute.xlu0 %543
        %v546 = vunpack.c.l.b16 %v541
        %v547 = vpack.c.b16 %v546, %v546
        %548 = vrot.lane.b32.xlu0 %v547, 122
        %v549 = vpop.permute.xlu0 %548
        %v552 = vsel %vm355, %v541, %v544
        %s553 = scalar_lea.vmem %s1, 8
        %v554 = vld [vmem:[%s553] sm:$0xf]
        %v555 = vld [vmem:[%s553 + $0x4] sm:$0xf]
        %s556 = scalar_lea.vmem %s2, 16
        %v557 = vld [vmem:[%s556] sm:$0xff]
        %v558 = vld [vmem:[%s556 + $0x8] sm:$0xff]
        %560 = vset.pattern.permute.xlu0 0
        %561 = vperm.xlu0 %560, %v557
        %v562 = vpop.permute.xlu0 %561
        %565 = vset.pattern.permute.xlu0 0
        %566 = vperm.xlu0 %565, %v558
        %v567 = vpop.permute.xlu0 %566
        %v571 = vunpack.c.l.b16 %v554
        %v572 = vunpack.c.l.b16 %v555
        %v573 = vpack.c.b16 %v572, %v571
        %575 = vrot.lane.b32.xlu0 %v552, 122
        %v576 = vpop.permute.xlu0 %575
        %577 = vrot.lane.b32.xlu0 %v549, 122
        %v578 = vpop.permute.xlu0 %577
        %v581 = vsel %vm384, %v573, 0
        %v584 = vsel %vm355, %v578, 0
        %586 = vmatprep.subr.bf16.mxu0 0
        %587 = vmatpush1.bf16.msra.mxu0 0
        %588 = vmatprep.subr.bf16.mxu0 0
        %589 = vmatpush1.bf16.msra.mxu0 0
        %590 = vmatprep.subr.bf16.mxu0 0
        %591 = vmatpush1.bf16.msra.mxu0 0
        %592 = vmatprep.subr.bf16.mxu0 0
        %593 = vmatpush1.bf16.msra.mxu0 0
        %594 = vmatprep.subr.bf16.mxu0 0
        %595 = vmatpush1.bf16.msra.mxu0 0
        %596 = vmatprep.subr.bf16.mxu0 0
        %597 = vmatpush1.bf16.msra.mxu0 0
        %598 = vmatprep.subr.bf16.mxu0 0
        %599 = vmatpush1.bf16.msra.mxu0 %v584
        %600 = vmatprep.subr.bf16.mxu0 0
        %601 = vmatpush1.bf16.msra.mxu0 %v576
        %602 = vmatprep.subr.bf16.mxu0 0
        %603 = vmatpush2.bf16.msra.mxu0 0
        %604 = vmatprep.subr.bf16.mxu0 0
        %605 = vmatpush2.bf16.msra.mxu0 0
        %606 = vmatprep.subr.bf16.mxu0 0
        %607 = vmatpush2.bf16.msra.mxu0 0
        %608 = vmatprep.subr.bf16.mxu0 0
        %609 = vmatpush2.bf16.msra.mxu0 0
        %610 = vmatprep.subr.bf16.mxu0 0
        %611 = vmatpush2.bf16.msra.mxu0 0
        %612 = vmatprep.subr.bf16.mxu0 0
        %613 = vmatpush2.bf16.msra.mxu0 0
        %614 = vmatprep.subr.bf16.mxu0 0
        %615 = vmatpush2.bf16.msra.mxu0 0
        %616 = vmatprep.subr.bf16.mxu0 0
        %617 = vmatpush2.bf16.msra.mxu0 0
        %618 = vmatprep.mubr.bf16.mxu0 0
        %619 = vmatmul.mubr.bf16.gmra.mxu0 %v581
        %v620 = vpop.f32.mrf.mxu0
        %v621 = vadd.f32 %v562, %v620
        %v622 = vpop.f32.mrf.mxu0
        %v623 = vpop.f32.mrf.mxu0
        %v624 = vadd.f32 %v567, %v623
        %v625 = vpop.f32.mrf.mxu0
        %626 = vdwg.mxu0
        %vm627 = vcmp.gt.f32.partialorder %v621, 0.0
        %v628 = vmin.f32 %v621, 0.0
        %v629 = vmul.f32 %v628, 1.442695
        %v630 = vpow.pop %v629
        %v631 = vsub.f32 %v630, 1.0
        %v632 = vsel %vm627, %v621, %v631
        %s633 = scalar_lea.vmem %s3, 4
        %v634 = vld [vmem:[%s633] sm:$0xf]
        %v635 = vpack.c.bf16 %v632, %v632
        %s636 = scalar_lea.vmem %s4, 8
        %v637 = vld [vmem:[%s636] sm:$0xff]
        %639 = vset.pattern.permute.xlu0 0
        %640 = vperm.xlu0 %639, %v637
        %v641 = vpop.permute.xlu0 %640
        %v644 = vsel %vm446, %v634, 0
        %v647 = vsel %vm355, %v635, 0
        %649 = vmatprep.subr.bf16.mxu0 0
        %650 = vmatpush1.bf16.msra.mxu0 0
        %651 = vmatprep.subr.bf16.mxu0 0
        %652 = vmatpush1.bf16.msra.mxu0 0
        %653 = vmatprep.subr.bf16.mxu0 0
        %654 = vmatpush1.bf16.msra.mxu0 0
        %655 = vmatprep.subr.bf16.mxu0 0
        %656 = vmatpush1.bf16.msra.mxu0 0
        %657 = vmatprep.subr.bf16.mxu0 0
        %658 = vmatpush1.bf16.msra.mxu0 0
        %659 = vmatprep.subr.bf16.mxu0 0
        %660 = vmatpush1.bf16.msra.mxu0 0
        %661 = vmatprep.subr.bf16.mxu0 0
        %662 = vmatpush1.bf16.msra.mxu0 0
        %663 = vmatprep.subr.bf16.mxu0 0
        %664 = vmatpush1.bf16.msra.mxu0 %v647
        %665 = vmatprep.subr.bf16.mxu0 0
        %666 = vmatpush2.bf16.msra.mxu0 0
        %667 = vmatprep.subr.bf16.mxu0 0
        %668 = vmatpush2.bf16.msra.mxu0 0
        %669 = vmatprep.subr.bf16.mxu0 0
        %670 = vmatpush2.bf16.msra.mxu0 0
        %671 = vmatprep.subr.bf16.mxu0 0
        %672 = vmatpush2.bf16.msra.mxu0 0
        %673 = vmatprep.subr.bf16.mxu0 0
        %674 = vmatpush2.bf16.msra.mxu0 0
        %675 = vmatprep.subr.bf16.mxu0 0
        %676 = vmatpush2.bf16.msra.mxu0 0
        %677 = vmatprep.subr.bf16.mxu0 0
        %678 = vmatpush2.bf16.msra.mxu0 0
        %679 = vmatprep.subr.bf16.mxu0 0
        %680 = vmatpush2.bf16.msra.mxu0 0
        %681 = vmatprep.mubr.bf16.mxu0 0
        %682 = vmatmul.mubr.bf16.gmra.mxu0 %v644
        %v683 = vpop.f32.mrf.mxu0
        %v684 = vadd.f32 %v641, %v683
        %v685 = vpop.f32.mrf.mxu0
        %v686 = vpop.f32.mrf.mxu0
        %v687 = vpop.f32.mrf.mxu0
        %688 = vdwg.mxu0
        %vm689 = vcmp.gt.f32.partialorder %v684, 0.0
        %v690 = vmin.f32 %v684, 0.0
        %v691 = vmul.f32 %v690, 1.442695
        %v692 = vpow.pop %v691
        %v693 = vsub.f32 %v692, 1.0
        %v694 = vsel %vm689, %v684, %v693
        %v695 = vadd.f32 %v694, %v624
        %v696 = vpack.c.bf16 %v695, %v695
        %v698 = vunpack.c.l.b16 %v696
        %v699 = vpack.c.b16 %v698, %v698
        %700 = vrot.lane.b32.xlu0 %v699, 9
        %v701 = vpop.permute.xlu0 %700
        %703 = vst.msk [vmem:[#allocation2] sm:$0xf] %vm309, %v701
        // Predicated region
        $region57: #{tpu_custom_call.1} parent=47 // pred_check
          %p704 = pneg %p311
        $region58: #{tpu_custom_call.1} parent=47 // pred_check_branch
          %706 = sbr.rel (%p704) target = $region60
        $region59: #{tpu_custom_call.1} parent=47 // pred_region
          %v707 = vld [vmem:[#allocation2] sm:$0xf]
          %709 = vset.pattern.permute.xlu0 23
          %710 = vperm.xlu0 %709, %v707
          %v711 = vpop.permute.xlu0 %710
          %v714 = vunpack.c.l.s4 839922192
          %v715 = vunpack.c.0.s8 %v714
          %v716 = vlaneseq
          %v717 = vshrl.u32 %v716, 7
          %v718 = vsub.s32 %v715, %v717
          %v719 = vrot.slane %v711, %v718
          %vm720 = vcmask 183296
          %721 = vst.msk [vmem:[#allocation2] sm:$0xf] %vm720, %v719
          %v722 = vld [vmem:[#allocation2] sm:$0xf]
          %724 = vset.pattern.permute.xlu0 38
          %725 = vperm.xlu0 %724, %v722
          %v726 = vpop.permute.xlu0 %725
          %v729 = vunpack.c.l.s4 839922192
          %v730 = vunpack.c.0.s8 %v729
          %v731 = vlaneseq
          %v732 = vshrl.u32 %v731, 7
          %v733 = vsub.s32 %v730, %v732
          %v734 = vrot.slane %v726, %v733
          %vm735 = vcmask 511288
          %736 = vst.msk [vmem:[#allocation2] sm:$0xf] %vm735, %v734
        $region60: #{tpu_custom_call.1} parent=47 // pred_fallthru
          _
        %v737 = vld [vmem:[#allocation2] sm:$0xf]
        %v738 = vrot.slane %v696, 4
        %v740 = vunpack.c.l.b16 %v737
        %v741 = vpack.c.b16 %v740, %v740
        %742 = vrot.lane.b32.xlu0 %v741, 110
        %v743 = vpop.permute.xlu0 %742
        %v746 = vsel %vm355, %v737, %v738
        %s748 = scalar_lea.vmem %s1, 16
        %v749 = vld [vmem:[%s748] sm:$0xf]
        %v750 = vld [vmem:[%s748 + $0x4] sm:$0xf]
        %s751 = scalar_lea.vmem %s2, 32
        %v752 = vld [vmem:[%s751] sm:$0xff]
        %v753 = vld [vmem:[%s751 + $0x8] sm:$0xff]
        %755 = vset.pattern.permute.xlu0 0
        %756 = vperm.xlu0 %755, %v752
        %v757 = vpop.permute.xlu0 %756
        %760 = vset.pattern.permute.xlu0 0
        %761 = vperm.xlu0 %760, %v753
        %v762 = vpop.permute.xlu0 %761
        %v766 = vunpack.c.l.b16 %v749
        %v767 = vunpack.c.l.b16 %v750
        %v768 = vpack.c.b16 %v767, %v766
        %v770 = vsel %vm384, %v768, 0
        %v773 = vsel %vm355, %v743, 0
        %775 = vmatprep.subr.bf16.mxu0 0
        %776 = vmatpush1.bf16.msra.mxu0 0
        %777 = vmatprep.subr.bf16.mxu0 0
        %778 = vmatpush1.bf16.msra.mxu0 0
        %779 = vmatprep.subr.bf16.mxu0 0
        %780 = vmatpush1.bf16.msra.mxu0 0
        %781 = vmatprep.subr.bf16.mxu0 0
        %782 = vmatpush1.bf16.msra.mxu0 0
        %783 = vmatprep.subr.bf16.mxu0 0
        %784 = vmatpush1.bf16.msra.mxu0 0
        %785 = vmatprep.subr.bf16.mxu0 0
        %786 = vmatpush1.bf16.msra.mxu0 0
        %787 = vmatprep.subr.bf16.mxu0 0
        %788 = vmatpush1.bf16.msra.mxu0 %v773
        %789 = vmatprep.subr.bf16.mxu0 0
        %790 = vmatpush1.bf16.msra.mxu0 %v746
        %791 = vmatprep.subr.bf16.mxu0 0
        %792 = vmatpush2.bf16.msra.mxu0 0
        %793 = vmatprep.subr.bf16.mxu0 0
        %794 = vmatpush2.bf16.msra.mxu0 0
        %795 = vmatprep.subr.bf16.mxu0 0
        %796 = vmatpush2.bf16.msra.mxu0 0
        %797 = vmatprep.subr.bf16.mxu0 0
        %798 = vmatpush2.bf16.msra.mxu0 0
        %799 = vmatprep.subr.bf16.mxu0 0
        %800 = vmatpush2.bf16.msra.mxu0 0
        %801 = vmatprep.subr.bf16.mxu0 0
        %802 = vmatpush2.bf16.msra.mxu0 0
        %803 = vmatprep.subr.bf16.mxu0 0
        %804 = vmatpush2.bf16.msra.mxu0 0
        %805 = vmatprep.subr.bf16.mxu0 0
        %806 = vmatpush2.bf16.msra.mxu0 0
        %807 = vmatprep.mubr.bf16.mxu0 0
        %808 = vmatmul.mubr.bf16.gmra.mxu0 %v770
        %v809 = vpop.f32.mrf.mxu0
        %v810 = vadd.f32 %v757, %v809
        %v811 = vpop.f32.mrf.mxu0
        %v812 = vpop.f32.mrf.mxu0
        %v813 = vadd.f32 %v762, %v812
        %v814 = vpop.f32.mrf.mxu0
        %815 = vdwg.mxu0
        %vm816 = vcmp.gt.f32.partialorder %v810, 0.0
        %v817 = vmin.f32 %v810, 0.0
        %v818 = vmul.f32 %v817, 1.442695
        %v819 = vpow.pop %v818
        %v820 = vsub.f32 %v819, 1.0
        %v821 = vsel %vm816, %v810, %v820
        %s822 = scalar_lea.vmem %s3, 8
        %v823 = vld [vmem:[%s822] sm:$0xf]
        %v824 = vpack.c.bf16 %v821, %v821
        %s825 = scalar_lea.vmem %s4, 16
        %v826 = vld [vmem:[%s825] sm:$0xff]
        %828 = vset.pattern.permute.xlu0 0
        %829 = vperm.xlu0 %828, %v826
        %v830 = vpop.permute.xlu0 %829
        %v833 = vsel %vm446, %v823, 0
        %v836 = vsel %vm355, %v824, 0
        %838 = vmatprep.subr.bf16.mxu0 0
        %839 = vmatpush1.bf16.msra.mxu0 0
        %840 = vmatprep.subr.bf16.mxu0 0
        %841 = vmatpush1.bf16.msra.mxu0 0
        %842 = vmatprep.subr.bf16.mxu0 0
        %843 = vmatpush1.bf16.msra.mxu0 0
        %844 = vmatprep.subr.bf16.mxu0 0
        %845 = vmatpush1.bf16.msra.mxu0 0
        %846 = vmatprep.subr.bf16.mxu0 0
        %847 = vmatpush1.bf16.msra.mxu0 0
        %848 = vmatprep.subr.bf16.mxu0 0
        %849 = vmatpush1.bf16.msra.mxu0 0
        %850 = vmatprep.subr.bf16.mxu0 0
        %851 = vmatpush1.bf16.msra.mxu0 0
        %852 = vmatprep.subr.bf16.mxu0 0
        %853 = vmatpush1.bf16.msra.mxu0 %v836
        %854 = vmatprep.subr.bf16.mxu0 0
        %855 = vmatpush2.bf16.msra.mxu0 0
        %856 = vmatprep.subr.bf16.mxu0 0
        %857 = vmatpush2.bf16.msra.mxu0 0
        %858 = vmatprep.subr.bf16.mxu0 0
        %859 = vmatpush2.bf16.msra.mxu0 0
        %860 = vmatprep.subr.bf16.mxu0 0
        %861 = vmatpush2.bf16.msra.mxu0 0
        %862 = vmatprep.subr.bf16.mxu0 0
        %863 = vmatpush2.bf16.msra.mxu0 0
        %864 = vmatprep.subr.bf16.mxu0 0
        %865 = vmatpush2.bf16.msra.mxu0 0
        %866 = vmatprep.subr.bf16.mxu0 0
        %867 = vmatpush2.bf16.msra.mxu0 0
        %868 = vmatprep.subr.bf16.mxu0 0
        %869 = vmatpush2.bf16.msra.mxu0 0
        %870 = vmatprep.mubr.bf16.mxu0 0
        %871 = vmatmul.mubr.bf16.gmra.mxu0 %v833
        %v872 = vpop.f32.mrf.mxu0
        %v873 = vadd.f32 %v830, %v872
        %v874 = vpop.f32.mrf.mxu0
        %v875 = vpop.f32.mrf.mxu0
        %v876 = vpop.f32.mrf.mxu0
        %877 = vdwg.mxu0
        %vm878 = vcmp.gt.f32.partialorder %v873, 0.0
        %v879 = vmin.f32 %v873, 0.0
        %v880 = vmul.f32 %v879, 1.442695
        %v881 = vpow.pop %v880
        %v882 = vsub.f32 %v881, 1.0
        %v883 = vsel %vm878, %v873, %v882
        %v884 = vadd.f32 %v883, %v813
        %v885 = vpack.c.bf16 %v884, %v884
        %v887 = vunpack.c.l.b16 %v885
        %v888 = vpack.c.b16 %v887, %v887
        %889 = vrot.lane.b32.xlu0 %v888, 9
        %v890 = vpop.permute.xlu0 %889
        %892 = vst.msk [vmem:[#allocation2] sm:$0xf] %vm309, %v890
        // Predicated region
        $region61: #{tpu_custom_call.1} parent=47 // pred_check
          %p893 = pneg %p311
        $region62: #{tpu_custom_call.1} parent=47 // pred_check_branch
          %895 = sbr.rel (%p893) target = $region64
        $region63: #{tpu_custom_call.1} parent=47 // pred_region
          %v896 = vld [vmem:[#allocation2] sm:$0xf]
          %898 = vset.pattern.permute.xlu0 23
          %899 = vperm.xlu0 %898, %v896
          %v900 = vpop.permute.xlu0 %899
          %v903 = vunpack.c.l.s4 839922192
          %v904 = vunpack.c.0.s8 %v903
          %v905 = vlaneseq
          %v906 = vshrl.u32 %v905, 7
          %v907 = vsub.s32 %v904, %v906
          %v908 = vrot.slane %v900, %v907
          %vm909 = vcmask 183296
          %910 = vst.msk [vmem:[#allocation2] sm:$0xf] %vm909, %v908
          %v911 = vld [vmem:[#allocation2] sm:$0xf]
          %913 = vset.pattern.permute.xlu0 38
          %914 = vperm.xlu0 %913, %v911
          %v915 = vpop.permute.xlu0 %914
          %v918 = vunpack.c.l.s4 839922192
          %v919 = vunpack.c.0.s8 %v918
          %v920 = vlaneseq
          %v921 = vshrl.u32 %v920, 7
          %v922 = vsub.s32 %v919, %v921
          %v923 = vrot.slane %v915, %v922
          %vm924 = vcmask 511288
          %925 = vst.msk [vmem:[#allocation2] sm:$0xf] %vm924, %v923
        $region64: #{tpu_custom_call.1} parent=47 // pred_fallthru
          _
        %v926 = vld [vmem:[#allocation2] sm:$0xf]
        %v928 = vunpack.c.l.b16 %v926
        %v929 = vpack.c.b16 %v928, %v928
        %930 = vrot.lane.b32.xlu0 %v929, 127
        %v931 = vpop.permute.xlu0 %930
        %932 = vrot.lane.b32.xlu0 %v929, 126
        %v933 = vpop.permute.xlu0 %932
        %934 = vrot.lane.b32.xlu0 %v929, 125
        %v935 = vpop.permute.xlu0 %934
        %v938 = vsel %vm355, %v926, %v931
        %v941 = vsel %vm355, %v933, %v935
        %v942 = vld [vmem:[%s5] sm:$0xf]
        %v943 = vld [vmem:[%s5 + $0x4] sm:$0xf]
        %v944 = vld [vmem:[%s6] sm:$0xff]
        %v945 = vld [vmem:[%s6 + $0x8] sm:$0xff]
        %947 = vset.pattern.permute.xlu0 0
        %948 = vperm.xlu0 %947, %v944
        %v949 = vpop.permute.xlu0 %948
        %952 = vset.pattern.permute.xlu0 0
        %953 = vperm.xlu0 %952, %v945
        %v954 = vpop.permute.xlu0 %953
        %v958 = vunpack.c.l.b16 %v942
        %v959 = vunpack.c.l.b16 %v943
        %v960 = vpack.c.b16 %v959, %v958
        %963 = vrot.lane.b32.xlu0 %v938, 106
        %v964 = vpop.permute.xlu0 %963
        %965 = vrot.lane.b32.xlu0 %v941, 106
        %v966 = vpop.permute.xlu0 %965
        %vm969 = vcmask 261120
        %v971 = vsel %vm969, %v960, 0
        %973 = vmatprep.subr.bf16.mxu0 0
        %974 = vmatpush1.bf16.msra.mxu0 0
        %975 = vmatprep.subr.bf16.mxu0 0
        %976 = vmatpush1.bf16.msra.mxu0 0
        %977 = vmatprep.subr.bf16.mxu0 0
        %978 = vmatpush1.bf16.msra.mxu0 0
        %979 = vmatprep.subr.bf16.mxu0 0
        %980 = vmatpush1.bf16.msra.mxu0 0
        %981 = vmatprep.subr.bf16.mxu0 0
        %982 = vmatpush1.bf16.msra.mxu0 0
        %983 = vmatprep.subr.bf16.mxu0 0
        %984 = vmatpush1.bf16.msra.mxu0 0
        %985 = vmatprep.subr.bf16.mxu0 0
        %986 = vmatpush1.bf16.msra.mxu0 %v966
        %987 = vmatprep.subr.bf16.mxu0 0
        %988 = vmatpush1.bf16.msra.mxu0 %v964
        %989 = vmatprep.subr.bf16.mxu0 0
        %990 = vmatpush2.bf16.msra.mxu0 0
        %991 = vmatprep.subr.bf16.mxu0 0
        %992 = vmatpush2.bf16.msra.mxu0 0
        %993 = vmatprep.subr.bf16.mxu0 0
        %994 = vmatpush2.bf16.msra.mxu0 0
        %995 = vmatprep.subr.bf16.mxu0 0
        %996 = vmatpush2.bf16.msra.mxu0 0
        %997 = vmatprep.subr.bf16.mxu0 0
        %998 = vmatpush2.bf16.msra.mxu0 0
        %999 = vmatprep.subr.bf16.mxu0 0
        %1000 = vmatpush2.bf16.msra.mxu0 0
        %1001 = vmatprep.subr.bf16.mxu0 0
        %1002 = vmatpush2.bf16.msra.mxu0 0
        %1003 = vmatprep.subr.bf16.mxu0 0
        %1004 = vmatpush2.bf16.msra.mxu0 0
        %1005 = vmatprep.mubr.bf16.mxu0 0
        %1006 = vmatmul.mubr.bf16.gmra.mxu0 %v971
        %v1007 = vpop.f32.mrf.mxu0
        %v1008 = vadd.f32 %v949, %v1007
        %v1009 = vpop.f32.mrf.mxu0
        %v1010 = vpop.f32.mrf.mxu0
        %v1011 = vadd.f32 %v954, %v1010
        %v1012 = vpop.f32.mrf.mxu0
        %1013 = vdwg.mxu0
        %vm1014 = vcmp.gt.f32.partialorder %v1008, 0.0
        %vm1015 = vcmp.gt.f32.partialorder %v1011, 0.0
        %v1016 = vmin.f32 %v1008, 0.0
        %v1017 = vmin.f32 %v1011, 0.0
        %v1018 = vmul.f32 %v1016, 1.442695
        %v1019 = vpow.pop %v1018
        %v1020 = vmul.f32 %v1017, 1.442695
        %v1021 = vpow.pop %v1020
        %v1022 = vsub.f32 %v1019, 1.0
        %v1023 = vsub.f32 %v1021, 1.0
        %v1024 = vsel %vm1014, %v1008, %v1022
        %v1025 = vsel %vm1015, %v1011, %v1023
        %vm1026 = vcmask 130048
        %1027 = vst.msk [vmem:[%s291] sm:$0xff] %vm1026, %v1024
        %1028 = vst.msk [vmem:[%s291 + $0x8] sm:$0xff] %vm1026, %v1025
        %s1029 = sand.u32 %s197, 1
        %s1030 = scalar_lea.sflag [#allocation4], %s1029
        %s1031 = sand.u32 %s197, 1
        %s1032 = smul.addr %s1031, 16
        %s1033 = scalar_lea.vmem [#allocation3], %s1032
        // Predicated region
        $region65: #{tpu_custom_call.1} parent=47 // pred_check
          %p1034 = pneg %p207
        $region66: #{tpu_custom_call.1} parent=47 // pred_check_branch
          %1036 = sbr.rel (%p1034) target = $region68
        $region67: #{tpu_custom_call.1} parent=47 // pred_region
          %s1038 = ssub.s32 256, 256
          %1039 = vsyncadd %s1030, %s1038
          %s1040 = smul.addr %s25, 2
          %s1041 = sadd.s32 %s26, %s1040
          %s1042 = smul.addr %s1041, 128
          %s1043 = scalar_lea.hbm %s7, %s1042
          %s1044 = sshll.u32 %s1033, 4
          %s1045 = int_to_ptr.vmem [resolvable:$true] %s1044
          %1050 = dma.vmem_to_hbm [thread:$0]  %s1045, 256, %s1043, %s1030, 128, 128, 8
        $region68: #{tpu_custom_call.1} parent=47 // pred_fallthru
          _
      $region48: #{tpu_custom_call.1} parent=5 // pred_fallthru
        _
      %p1051 = scmp.le.s32.totalorder 2, %s16
      // Predicated region
      $region69: #{tpu_custom_call.1} parent=5 // pred_check
        %p1052 = pneg %p1051
      $region70: #{tpu_custom_call.1} parent=5 // pred_check_branch
        %1054 = sbr.rel (%p1052) target = $region72
      $region71: #{tpu_custom_call.1} parent=5 // pred_region
        %s1055 = ssub.s32 %s16, 2
        // Predicated region
        $region73: #{tpu_custom_call.1} parent=71 // pred_check
          %p1056 = pneg %p213
        $region74: #{tpu_custom_call.1} parent=71 // pred_check_branch
          %1058 = sbr.rel (%p1056) target = $region76
        $region75: #{tpu_custom_call.1} parent=71 // pred_region
          %s1059 = sand.u32 %s198, 1
          %s1060 = scalar_lea.sflag [#allocation4], %s1059
          %s1061 = sand.u32 %s198, 1
          %s1062 = smul.addr %s1061, 16
          %s1063 = scalar_lea.vmem [#allocation3], %s1062
          %1064 = dma.done %s1060, 256
        $region76: #{tpu_custom_call.1} parent=71 // pred_fallthru
          _
      $region72: #{tpu_custom_call.1} parent=5 // pred_fallthru
        _
    $region6: #{tpu_custom_call.1} parent=1 // loop_footer
      %s20 = sadd.s32 1, %s16
    $region7: #{tpu_custom_call.1} parent=1 // loop_footer_branch
      %15 = sbr.rel target = $region3
    $region8: #{tpu_custom_call.1} parent=1 // loop_exit
      _
    %1065 = vsyncpa [#allocation4], 1
    %s1066 = scalar_lea.sflag [#allocation4], 1
    %1067 = vsyncpa %s1066, 1

</llo_original>
